<compile_context>
chip_gen: v5e
topology: v5e:2x2
jax: 0.10.0
libtpu: 0.0.40
codegen_flags: <defaults>
</compile_context>

<pallas_src>
import functools

import jax
import jax.numpy as jnp
from jax.experimental import pallas as pl
from jax.experimental.pallas import tpu as pltpu

EPS = 1e-5


def resblock_kernel(x_ref,        # (Cin_p, M)          matmul_dtype, channel-major input
                    masks_ref,    # (8, M)              matmul_dtype, 0/1 tap-validity masks
                    w1s_ref,      # (9, 2*Cout, Cin_p)  matmul_dtype, conv1 + shortcut taps
                    w2_ref,       # (9, Cout, Cout)     matmul_dtype, conv2 taps
                    g1_ref, be1_ref,   # (Cout, 1) f32   bn1 gamma / beta
                    g2_ref, be2_ref,   # (Cout, 1) f32   bn2 gamma / beta
                    bs_ref,            # (Cout, 1) f32   shortcut conv bias
                    o_ref,        # (Cout, M) f32       lane-dense output
                    *, W):
    _, M = x_ref.shape
    Cout = o_ref.shape[0]

    def conv3x3(src, w_ref, nrows):
        # src: (C, M) in matmul_dtype.  For tap t the shifted view is a lane
        # rotation (XLU) + 0/1 mask; the wrapped lanes are exactly the masked
        # ones, so this reproduces SAME/zero padding exactly.  Per-tap matmuls
        # accumulate into an f32 value (no im2col slab is materialized).
        acc = jnp.zeros((nrows, M), jnp.float32)
        mi = 0
        for t in range(9):
            dy, dx = t // 3 - 1, t % 3 - 1
            s = dy * W + dx
            piece = src if s == 0 else pltpu.roll(src, shift=(-s) % M, axis=1)
            if t != 4:
                piece = piece * masks_ref[mi:mi + 1, :]
                mi += 1
            acc = acc + jnp.dot(w_ref[t], piece,
                                preferred_element_type=jnp.float32)
        return acc

    def batchnorm(y, g, be):
        # training-mode BN: per-channel (row) stats over all N*H*W lanes,
        # biased variance, eps=1e-5.  Single pass; clamp var>=0 (E[y^2]-mean^2
        # can go slightly negative in f32).
        inv_m = 1.0 / M
        mean = jnp.sum(y, axis=1, keepdims=True) * inv_m
        var = jnp.maximum(jnp.sum(y * y, axis=1, keepdims=True) * inv_m
                          - mean * mean, 0.0)
        return (y - mean) * (jax.lax.rsqrt(var + EPS) * g) + be

    x = x_ref[...]

    # ---- conv1 + shortcut conv, fused along the output-channel axis ----------
    ycat = conv3x3(x, w1s_ref, 2 * Cout)                     # (2*Cout, M) f32
    y1 = ycat[:Cout, :]
    ys = ycat[Cout:, :] + bs_ref[...]      # shortcut keeps its bias (no BN after)
    # conv1/conv2 biases are omitted: exactly cancelled by BN mean subtraction
    # (valid for training-mode / batch-statistics BN only).

    h1 = jnp.maximum(batchnorm(y1, g1_ref[...], be1_ref[...]), 0.0)

    # ---- conv2 + bn2 ----------------------------------------------------------
    y2 = conv3x3(h1.astype(x.dtype), w2_ref, Cout)           # (Cout, M) f32
    h2 = batchnorm(y2, g2_ref[...], be2_ref[...])

    # ---- residual add + relu, full-width lane-dense store ---------------------
    o_ref[...] = jnp.maximum(h2 + ys, 0.0)


def residual_block_pallas(x_nchw, p, matmul_dtype=jnp.bfloat16):
    N, Cin, H, W = x_nchw.shape
    Cout = p["w1"].shape[-1]
    M = N * H * W
    assert Cout % 8 == 0, "Cout must be a multiple of 8 (sublane alignment)"
    assert M % 128 == 0, "N*H*W must be a multiple of 128 (lane-dense layout)"
    Cin_p = max(8, ((Cin + 7) // 8) * 8)      # sublane-align input channels

    # channel-major, lane-dense layout (C, N*H*W); cast once so the activation
    # stream is DMA'd at matmul width (half the bytes in the bf16 path).
    x_cm = jnp.transpose(x_nchw, (1, 0, 2, 3)).reshape(Cin, M)
    x_cm = jnp.pad(x_cm, ((0, Cin_p - Cin), (0, 0))).astype(matmul_dtype)

    # per-tap 0/1 validity masks for the 8 non-center taps (corner products
    # pre-fused wrapper-side); same loop order as the kernel.
    idx = jnp.arange(M, dtype=jnp.int32)
    h_idx = (idx // W) % H
    w_idx = idx % W
    row = {-1: h_idx >= 1, 0: None, 1: h_idx <= H - 2}
    col = {-1: w_idx >= 1, 0: None, 1: w_idx <= W - 2}
    mask_rows = []
    for t in range(9):
        if t == 4:
            continue
        dy, dx = t // 3 - 1, t % 3 - 1
        m = jnp.ones((M,), jnp.float32)
        if row[dy] is not None:
            m = m * row[dy]
        if col[dx] is not None:
            m = m * col[dx]
        mask_rows.append(m)
    masks = jnp.stack(mask_rows).astype(matmul_dtype)            # (8, M)

    def to_taps(w_hwio, cpad):
        # (3,3,Ci,Co) HWIO -> (9, Co, cpad) with t = ky*3 + kx
        co = w_hwio.shape[3]
        w_p = jnp.pad(w_hwio, ((0, 0), (0, 0),
                               (0, cpad - w_hwio.shape[2]), (0, 0)))
        return jnp.transpose(w_p, (0, 1, 3, 2)).reshape(9, co, cpad)

    # fuse conv1 + shortcut along output channels; cast weights once here
    w1s = jnp.concatenate([to_taps(p["w1"], Cin_p), to_taps(p["ws"], Cin_p)],
                          axis=1).astype(matmul_dtype)           # (9, 2*Cout, Cin_p)
    w2k = to_taps(p["w2"], Cout).astype(matmul_dtype)            # (9, Cout, Cout)

    g1 = p["g1"].reshape(Cout, 1)
    be1 = p["be1"].reshape(Cout, 1)
    g2 = p["g2"].reshape(Cout, 1)
    be2 = p["be2"].reshape(Cout, 1)
    bs = p["bs"].reshape(Cout, 1)

    # explicit VMEM budget + cost hint (default scoped VMEM is 16/32 MiB)
    d_in = jnp.dtype(matmul_dtype).itemsize
    in_bytes = (Cin_p * M + 8 * M + w1s.size + w2k.size) * d_in + 5 * Cout * 4
    out_bytes = Cout * M * 4
    work_bytes = 6 * Cout * M * 4           # ycat / h1 / y2 f32 live values + slack
    vmem_limit = int(min(64 << 20,
                         max(16 << 20, 2 * (in_bytes + out_bytes + work_bytes))))
    flops = 2 * (2 * Cout) * (9 * Cin_p) * M + 2 * Cout * (9 * Cout) * M

    vmem = pl.BlockSpec(memory_space=pltpu.MemorySpace.VMEM)
    out_cm = pl.pallas_call(
        functools.partial(resblock_kernel, W=W),
        out_shape=jax.ShapeDtypeStruct((Cout, M), jnp.float32),
        in_specs=[vmem] * 9,
        out_specs=vmem,
        compiler_params=pltpu.CompilerParams(vmem_limit_bytes=vmem_limit),
        cost_estimate=pl.CostEstimate(flops=flops, transcendentals=2 * Cout,
                                      bytes_accessed=in_bytes + out_bytes),
    )(x_cm, masks, w1s, w2k, g1, be1, g2, be2, bs)

    # (Cout, N*H*W) -> NCHW (PyTorch layout); wrapper-side layout plumbing only
    return jnp.transpose(out_cm.reshape(Cout, N, H, W), (1, 0, 2, 3))


def residual_block_reference(x_nchw, p):
    """Pure-JAX reference with the module's exact forward semantics."""
    def conv(x, w, b):
        y = jax.lax.conv_general_dilated(
            x, w, window_strides=(1, 1), padding="SAME",
            dimension_numbers=("NCHW", "HWIO", "NCHW"),
            precision=jax.lax.Precision.HIGHEST)
        return y + b.reshape(1, -1, 1, 1)

    def bn(y, g, be):
        mean = jnp.mean(y, axis=(0, 2, 3), keepdims=True)
        var = jnp.mean((y - mean) ** 2, axis=(0, 2, 3), keepdims=True)
        return (y - mean) * jax.lax.rsqrt(var + EPS) * g.reshape(1, -1, 1, 1) \
               + be.reshape(1, -1, 1, 1)

    residual = conv(x_nchw, p["ws"], p["bs"])
    out = jax.nn.relu(bn(conv(x_nchw, p["w1"], p["b1"]), p["g1"], p["be1"]))
    out = bn(conv(out, p["w2"], p["b2"]), p["g2"], p["be2"])
    return jax.nn.relu(out + residual)


def make_params(key, cin, cout):
    ks = jax.random.split(key, 10)
    f = jnp.float32
    return {
        # conv weights in HWIO layout
        "w1": (0.1 * jax.random.normal(ks[0], (3, 3, cin, cout))).astype(f),
        "b1": (0.1 * jax.random.normal(ks[1], (cout,))).astype(f),
        "g1": (1.0 + 0.1 * jax.random.normal(ks[2], (cout,))).astype(f),
        "be1": (0.1 * jax.random.normal(ks[3], (cout,))).astype(f),
        "w2": (0.1 * jax.random.normal(ks[4], (3, 3, cout, cout))).astype(f),
        "b2": (0.1 * jax.random.normal(ks[5], (cout,))).astype(f),
        "g2": (1.0 + 0.1 * jax.random.normal(ks[6], (cout,))).astype(f),
        "be2": (0.1 * jax.random.normal(ks[7], (cout,))).astype(f),
        "ws": (0.1 * jax.random.normal(ks[8], (3, 3, cin, cout))).astype(f),
        "bs": (0.1 * jax.random.normal(ks[9], (cout,))).astype(f),
    }


if __name__ == "__main__":
    key = jax.random.PRNGKey(0)
    k_x, k_p = jax.random.split(key)

    N, C_in, C_out, H, W = 2, 4, 8, 16, 16
    x_nchw = jax.random.normal(k_x, (N, C_in, H, W), dtype=jnp.float32)
    params = make_params(k_p, C_in, C_out)

    ref = residual_block_reference(x_nchw, params)

    # strict check of the kernel logic with f32 matmul operands
    out_f32 = residual_block_pallas(x_nchw, params, matmul_dtype=jnp.float32)
    jax.block_until_ready(out_f32)
    assert out_f32.shape == (N, C_out, H, W)
    assert jnp.allclose(out_f32, ref, atol=2e-3, rtol=2e-3), \
        "f32 kernel mismatch vs reference"

    # fast path: bf16 operands (f32 accumulation, f32 BN statistics)
    out_bf16 = residual_block_pallas(x_nchw, params, matmul_dtype=jnp.bfloat16)
    jax.block_until_ready(out_bf16)
    assert out_bf16.shape == (N, C_out, H, W)
    assert jnp.allclose(out_bf16, ref, atol=5e-2, rtol=5e-2), \
        "bf16 kernel mismatch vs reference"

    print("KERNEL_OK")
</pallas_src>

<mosaic_0001>
module attributes {stable_mosaic.version = 11 : i64} {
  func.func @resblock_kernel(%arg0: memref<8x512xf32, #tpu.memory_space<vmem>>, %arg1: memref<8x512xf32, #tpu.memory_space<vmem>>, %arg2: memref<9x16x8xf32, #tpu.memory_space<vmem>>, %arg3: memref<9x8x8xf32, #tpu.memory_space<vmem>>, %arg4: memref<8x1xf32, #tpu.memory_space<vmem>>, %arg5: memref<8x1xf32, #tpu.memory_space<vmem>>, %arg6: memref<8x1xf32, #tpu.memory_space<vmem>>, %arg7: memref<8x1xf32, #tpu.memory_space<vmem>>, %arg8: memref<8x1xf32, #tpu.memory_space<vmem>>, %arg9: memref<8x512xf32, #tpu.memory_space<vmem>>) attributes {dimension_semantics = [], scalar_prefetch = 0 : i64, scratch_operands = 0 : i64, tpu.core_type = #tpu.core_type<tc>} {
    %c0 = arith.constant 0 : index
    %c0_0 = arith.constant 0 : index
    %0 = vector.load %arg0[%c0, %c0_0] : memref<8x512xf32, #tpu.memory_space<vmem>>, vector<8x512xf32>
    %cst = arith.constant 0.000000e+00 : f32
    %1 = vector.broadcast %cst : f32 to vector<16x512xf32>
    %c17_i32 = arith.constant 17 : i32
    %2 = tpu.dynamic_rotate %0 by %c17_i32 dim 1 : vector<8x512xf32>, i32 -> vector<8x512xf32>
    %c0_1 = arith.constant 0 : index
    %c0_2 = arith.constant 0 : index
    %3 = vector.load %arg1[%c0_1, %c0_2] : memref<8x512xf32, #tpu.memory_space<vmem>>, vector<1x512xf32>
    %4 = vector.broadcast %3 : vector<1x512xf32> to vector<8x512xf32>
    %5 = arith.mulf %2, %4 : vector<8x512xf32>
    %c0_3 = arith.constant 0 : index
    %c0_4 = arith.constant 0 : index
    %c0_5 = arith.constant 0 : index
    %6 = vector.load %arg2[%c0_3, %c0_4, %c0_5] : memref<9x16x8xf32, #tpu.memory_space<vmem>>, vector<1x16x8xf32>
    %7 = vector.shape_cast %6 : vector<1x16x8xf32> to vector<16x8xf32>
    %cst_6 = arith.constant dense<0.000000e+00> : vector<16x512xf32>
    %8 = tpu.matmul %7, %5, %cst_6 {dimension_numbers = #tpu.dot_dimension_numbers<[1], [0], [0], [1], [0, 0, 1, 1], [], []>} : vector<16x8xf32>, vector<8x512xf32>, vector<16x512xf32> -> vector<16x512xf32>
    %9 = arith.addf %1, %8 : vector<16x512xf32>
    %c16_i32 = arith.constant 16 : i32
    %10 = tpu.dynamic_rotate %0 by %c16_i32 dim 1 : vector<8x512xf32>, i32 -> vector<8x512xf32>
    %c1 = arith.constant 1 : index
    %c0_7 = arith.constant 0 : index
    %11 = vector.load %arg1[%c1, %c0_7] : memref<8x512xf32, #tpu.memory_space<vmem>>, vector<1x512xf32>
    %12 = vector.broadcast %11 : vector<1x512xf32> to vector<8x512xf32>
    %13 = arith.mulf %10, %12 : vector<8x512xf32>
    %c1_8 = arith.constant 1 : index
    %c0_9 = arith.constant 0 : index
    %c0_10 = arith.constant 0 : index
    %14 = vector.load %arg2[%c1_8, %c0_9, %c0_10] : memref<9x16x8xf32, #tpu.memory_space<vmem>>, vector<1x16x8xf32>
    %15 = vector.shape_cast %14 : vector<1x16x8xf32> to vector<16x8xf32>
    %cst_11 = arith.constant dense<0.000000e+00> : vector<16x512xf32>
    %16 = tpu.matmul %15, %13, %cst_11 {dimension_numbers = #tpu.dot_dimension_numbers<[1], [0], [0], [1], [0, 0, 1, 1], [], []>} : vector<16x8xf32>, vector<8x512xf32>, vector<16x512xf32> -> vector<16x512xf32>
    %17 = arith.addf %9, %16 : vector<16x512xf32>
    %c15_i32 = arith.constant 15 : i32
    %18 = tpu.dynamic_rotate %0 by %c15_i32 dim 1 : vector<8x512xf32>, i32 -> vector<8x512xf32>
    %c2 = arith.constant 2 : index
    %c0_12 = arith.constant 0 : index
    %19 = vector.load %arg1[%c2, %c0_12] : memref<8x512xf32, #tpu.memory_space<vmem>>, vector<1x512xf32>
    %20 = vector.broadcast %19 : vector<1x512xf32> to vector<8x512xf32>
    %21 = arith.mulf %18, %20 : vector<8x512xf32>
    %c2_13 = arith.constant 2 : index
    %c0_14 = arith.constant 0 : index
    %c0_15 = arith.constant 0 : index
    %22 = vector.load %arg2[%c2_13, %c0_14, %c0_15] : memref<9x16x8xf32, #tpu.memory_space<vmem>>, vector<1x16x8xf32>
    %23 = vector.shape_cast %22 : vector<1x16x8xf32> to vector<16x8xf32>
    %cst_16 = arith.constant dense<0.000000e+00> : vector<16x512xf32>
    %24 = tpu.matmul %23, %21, %cst_16 {dimension_numbers = #tpu.dot_dimension_numbers<[1], [0], [0], [1], [0, 0, 1, 1], [], []>} : vector<16x8xf32>, vector<8x512xf32>, vector<16x512xf32> -> vector<16x512xf32>
    %25 = arith.addf %17, %24 : vector<16x512xf32>
    %c1_i32 = arith.constant 1 : i32
    %26 = tpu.dynamic_rotate %0 by %c1_i32 dim 1 : vector<8x512xf32>, i32 -> vector<8x512xf32>
    %c3 = arith.constant 3 : index
    %c0_17 = arith.constant 0 : index
    %27 = vector.load %arg1[%c3, %c0_17] : memref<8x512xf32, #tpu.memory_space<vmem>>, vector<1x512xf32>
    %28 = vector.broadcast %27 : vector<1x512xf32> to vector<8x512xf32>
    %29 = arith.mulf %26, %28 : vector<8x512xf32>
    %c3_18 = arith.constant 3 : index
    %c0_19 = arith.constant 0 : index
    %c0_20 = arith.constant 0 : index
    %30 = vector.load %arg2[%c3_18, %c0_19, %c0_20] : memref<9x16x8xf32, #tpu.memory_space<vmem>>, vector<1x16x8xf32>
    %31 = vector.shape_cast %30 : vector<1x16x8xf32> to vector<16x8xf32>
    %cst_21 = arith.constant dense<0.000000e+00> : vector<16x512xf32>
    %32 = tpu.matmul %31, %29, %cst_21 {dimension_numbers = #tpu.dot_dimension_numbers<[1], [0], [0], [1], [0, 0, 1, 1], [], []>} : vector<16x8xf32>, vector<8x512xf32>, vector<16x512xf32> -> vector<16x512xf32>
    %33 = arith.addf %25, %32 : vector<16x512xf32>
    %c4 = arith.constant 4 : index
    %c0_22 = arith.constant 0 : index
    %c0_23 = arith.constant 0 : index
    %34 = vector.load %arg2[%c4, %c0_22, %c0_23] : memref<9x16x8xf32, #tpu.memory_space<vmem>>, vector<1x16x8xf32>
    %35 = vector.shape_cast %34 : vector<1x16x8xf32> to vector<16x8xf32>
    %cst_24 = arith.constant dense<0.000000e+00> : vector<16x512xf32>
    %36 = tpu.matmul %35, %0, %cst_24 {dimension_numbers = #tpu.dot_dimension_numbers<[1], [0], [0], [1], [0, 0, 1, 1], [], []>} : vector<16x8xf32>, vector<8x512xf32>, vector<16x512xf32> -> vector<16x512xf32>
    %37 = arith.addf %33, %36 : vector<16x512xf32>
    %c511_i32 = arith.constant 511 : i32
    %38 = tpu.dynamic_rotate %0 by %c511_i32 dim 1 : vector<8x512xf32>, i32 -> vector<8x512xf32>
    %c4_25 = arith.constant 4 : index
    %c0_26 = arith.constant 0 : index
    %39 = vector.load %arg1[%c4_25, %c0_26] : memref<8x512xf32, #tpu.memory_space<vmem>>, vector<1x512xf32>
    %40 = vector.broadcast %39 : vector<1x512xf32> to vector<8x512xf32>
    %41 = arith.mulf %38, %40 : vector<8x512xf32>
    %c5 = arith.constant 5 : index
    %c0_27 = arith.constant 0 : index
    %c0_28 = arith.constant 0 : index
    %42 = vector.load %arg2[%c5, %c0_27, %c0_28] : memref<9x16x8xf32, #tpu.memory_space<vmem>>, vector<1x16x8xf32>
    %43 = vector.shape_cast %42 : vector<1x16x8xf32> to vector<16x8xf32>
    %cst_29 = arith.constant dense<0.000000e+00> : vector<16x512xf32>
    %44 = tpu.matmul %43, %41, %cst_29 {dimension_numbers = #tpu.dot_dimension_numbers<[1], [0], [0], [1], [0, 0, 1, 1], [], []>} : vector<16x8xf32>, vector<8x512xf32>, vector<16x512xf32> -> vector<16x512xf32>
    %45 = arith.addf %37, %44 : vector<16x512xf32>
    %c497_i32 = arith.constant 497 : i32
    %46 = tpu.dynamic_rotate %0 by %c497_i32 dim 1 : vector<8x512xf32>, i32 -> vector<8x512xf32>
    %c5_30 = arith.constant 5 : index
    %c0_31 = arith.constant 0 : index
    %47 = vector.load %arg1[%c5_30, %c0_31] : memref<8x512xf32, #tpu.memory_space<vmem>>, vector<1x512xf32>
    %48 = vector.broadcast %47 : vector<1x512xf32> to vector<8x512xf32>
    %49 = arith.mulf %46, %48 : vector<8x512xf32>
    %c6 = arith.constant 6 : index
    %c0_32 = arith.constant 0 : index
    %c0_33 = arith.constant 0 : index
    %50 = vector.load %arg2[%c6, %c0_32, %c0_33] : memref<9x16x8xf32, #tpu.memory_space<vmem>>, vector<1x16x8xf32>
    %51 = vector.shape_cast %50 : vector<1x16x8xf32> to vector<16x8xf32>
    %cst_34 = arith.constant dense<0.000000e+00> : vector<16x512xf32>
    %52 = tpu.matmul %51, %49, %cst_34 {dimension_numbers = #tpu.dot_dimension_numbers<[1], [0], [0], [1], [0, 0, 1, 1], [], []>} : vector<16x8xf32>, vector<8x512xf32>, vector<16x512xf32> -> vector<16x512xf32>
    %53 = arith.addf %45, %52 : vector<16x512xf32>
    %c496_i32 = arith.constant 496 : i32
    %54 = tpu.dynamic_rotate %0 by %c496_i32 dim 1 : vector<8x512xf32>, i32 -> vector<8x512xf32>
    %c6_35 = arith.constant 6 : index
    %c0_36 = arith.constant 0 : index
    %55 = vector.load %arg1[%c6_35, %c0_36] : memref<8x512xf32, #tpu.memory_space<vmem>>, vector<1x512xf32>
    %56 = vector.broadcast %55 : vector<1x512xf32> to vector<8x512xf32>
    %57 = arith.mulf %54, %56 : vector<8x512xf32>
    %c7 = arith.constant 7 : index
    %c0_37 = arith.constant 0 : index
    %c0_38 = arith.constant 0 : index
    %58 = vector.load %arg2[%c7, %c0_37, %c0_38] : memref<9x16x8xf32, #tpu.memory_space<vmem>>, vector<1x16x8xf32>
    %59 = vector.shape_cast %58 : vector<1x16x8xf32> to vector<16x8xf32>
    %cst_39 = arith.constant dense<0.000000e+00> : vector<16x512xf32>
    %60 = tpu.matmul %59, %57, %cst_39 {dimension_numbers = #tpu.dot_dimension_numbers<[1], [0], [0], [1], [0, 0, 1, 1], [], []>} : vector<16x8xf32>, vector<8x512xf32>, vector<16x512xf32> -> vector<16x512xf32>
    %61 = arith.addf %53, %60 : vector<16x512xf32>
    %c495_i32 = arith.constant 495 : i32
    %62 = tpu.dynamic_rotate %0 by %c495_i32 dim 1 : vector<8x512xf32>, i32 -> vector<8x512xf32>
    %c7_40 = arith.constant 7 : index
    %c0_41 = arith.constant 0 : index
    %63 = vector.load %arg1[%c7_40, %c0_41] : memref<8x512xf32, #tpu.memory_space<vmem>>, vector<1x512xf32>
    %64 = vector.broadcast %63 : vector<1x512xf32> to vector<8x512xf32>
    %65 = arith.mulf %62, %64 : vector<8x512xf32>
    %c8 = arith.constant 8 : index
    %c0_42 = arith.constant 0 : index
    %c0_43 = arith.constant 0 : index
    %66 = vector.load %arg2[%c8, %c0_42, %c0_43] : memref<9x16x8xf32, #tpu.memory_space<vmem>>, vector<1x16x8xf32>
    %67 = vector.shape_cast %66 : vector<1x16x8xf32> to vector<16x8xf32>
    %cst_44 = arith.constant dense<0.000000e+00> : vector<16x512xf32>
    %68 = tpu.matmul %67, %65, %cst_44 {dimension_numbers = #tpu.dot_dimension_numbers<[1], [0], [0], [1], [0, 0, 1, 1], [], []>} : vector<16x8xf32>, vector<8x512xf32>, vector<16x512xf32> -> vector<16x512xf32>
    %69 = arith.addf %61, %68 : vector<16x512xf32>
    %70 = vector.extract_strided_slice %69 {offsets = [0, 0], sizes = [8, 512], strides = [1, 1]} : vector<16x512xf32> to vector<8x512xf32>
    %71 = vector.extract_strided_slice %69 {offsets = [8, 0], sizes = [8, 512], strides = [1, 1]} : vector<16x512xf32> to vector<8x512xf32>
    %c0_45 = arith.constant 0 : index
    %c0_46 = arith.constant 0 : index
    %72 = vector.load %arg8[%c0_45, %c0_46] : memref<8x1xf32, #tpu.memory_space<vmem>>, vector<8x1xf32>
    %73 = vector.broadcast %72 : vector<8x1xf32> to vector<8x512xf32>
    %74 = arith.addf %71, %73 : vector<8x512xf32>
    %c0_47 = arith.constant 0 : index
    %c0_48 = arith.constant 0 : index
    %75 = vector.load %arg4[%c0_47, %c0_48] : memref<8x1xf32, #tpu.memory_space<vmem>>, vector<8x1xf32>
    %c0_49 = arith.constant 0 : index
    %c0_50 = arith.constant 0 : index
    %76 = vector.load %arg5[%c0_49, %c0_50] : memref<8x1xf32, #tpu.memory_space<vmem>>, vector<8x1xf32>
    %cst_51 = arith.constant dense<0.000000e+00> : vector<8xf32>
    %77 = vector.multi_reduction <add>, %70, %cst_51 [1] : vector<8x512xf32> to vector<8xf32>
    %78 = vector.shape_cast %77 : vector<8xf32> to vector<8x1xf32>
    %cst_52 = arith.constant 0.001953125 : f32
    %79 = vector.broadcast %cst_52 : f32 to vector<8x1xf32>
    %80 = arith.mulf %78, %79 : vector<8x1xf32>
    %81 = arith.mulf %70, %70 : vector<8x512xf32>
    %cst_53 = arith.constant dense<0.000000e+00> : vector<8xf32>
    %82 = vector.multi_reduction <add>, %81, %cst_53 [1] : vector<8x512xf32> to vector<8xf32>
    %83 = vector.shape_cast %82 : vector<8xf32> to vector<8x1xf32>
    %cst_54 = arith.constant 0.001953125 : f32
    %84 = vector.broadcast %cst_54 : f32 to vector<8x1xf32>
    %85 = arith.mulf %83, %84 : vector<8x1xf32>
    %86 = arith.mulf %80, %80 : vector<8x1xf32>
    %87 = arith.subf %85, %86 : vector<8x1xf32>
    %cst_55 = arith.constant 0.000000e+00 : f32
    %88 = vector.broadcast %cst_55 : f32 to vector<8x1xf32>
    %89 = arith.maximumf %87, %88 : vector<8x1xf32>
    %90 = vector.broadcast %80 : vector<8x1xf32> to vector<8x512xf32>
    %91 = arith.subf %70, %90 : vector<8x512xf32>
    %cst_56 = arith.constant 9.99999974E-6 : f32
    %92 = vector.broadcast %cst_56 : f32 to vector<8x1xf32>
    %93 = arith.addf %89, %92 : vector<8x1xf32>
    %94 = math.rsqrt %93 : vector<8x1xf32>
    %95 = arith.mulf %94, %75 : vector<8x1xf32>
    %96 = vector.broadcast %95 : vector<8x1xf32> to vector<8x512xf32>
    %97 = arith.mulf %91, %96 : vector<8x512xf32>
    %98 = vector.broadcast %76 : vector<8x1xf32> to vector<8x512xf32>
    %99 = arith.addf %97, %98 : vector<8x512xf32>
    %cst_57 = arith.constant 0.000000e+00 : f32
    %100 = vector.broadcast %cst_57 : f32 to vector<8x512xf32>
    %101 = arith.maximumf %99, %100 : vector<8x512xf32>
    %cst_58 = arith.constant 0.000000e+00 : f32
    %102 = vector.broadcast %cst_58 : f32 to vector<8x512xf32>
    %c17_i32_59 = arith.constant 17 : i32
    %103 = tpu.dynamic_rotate %101 by %c17_i32_59 dim 1 : vector<8x512xf32>, i32 -> vector<8x512xf32>
    %c0_60 = arith.constant 0 : index
    %c0_61 = arith.constant 0 : index
    %104 = vector.load %arg1[%c0_60, %c0_61] : memref<8x512xf32, #tpu.memory_space<vmem>>, vector<1x512xf32>
    %105 = vector.broadcast %104 : vector<1x512xf32> to vector<8x512xf32>
    %106 = arith.mulf %103, %105 : vector<8x512xf32>
    %c0_62 = arith.constant 0 : index
    %c0_63 = arith.constant 0 : index
    %c0_64 = arith.constant 0 : index
    %107 = vector.load %arg3[%c0_62, %c0_63, %c0_64] : memref<9x8x8xf32, #tpu.memory_space<vmem>>, vector<1x8x8xf32>
    %108 = vector.shape_cast %107 : vector<1x8x8xf32> to vector<8x8xf32>
    %cst_65 = arith.constant dense<0.000000e+00> : vector<8x512xf32>
    %109 = tpu.matmul %108, %106, %cst_65 {dimension_numbers = #tpu.dot_dimension_numbers<[1], [0], [0], [1], [0, 0, 1, 1], [], []>} : vector<8x8xf32>, vector<8x512xf32>, vector<8x512xf32> -> vector<8x512xf32>
    %110 = arith.addf %102, %109 : vector<8x512xf32>
    %c16_i32_66 = arith.constant 16 : i32
    %111 = tpu.dynamic_rotate %101 by %c16_i32_66 dim 1 : vector<8x512xf32>, i32 -> vector<8x512xf32>
    %c1_67 = arith.constant 1 : index
    %c0_68 = arith.constant 0 : index
    %112 = vector.load %arg1[%c1_67, %c0_68] : memref<8x512xf32, #tpu.memory_space<vmem>>, vector<1x512xf32>
    %113 = vector.broadcast %112 : vector<1x512xf32> to vector<8x512xf32>
    %114 = arith.mulf %111, %113 : vector<8x512xf32>
    %c1_69 = arith.constant 1 : index
    %c0_70 = arith.constant 0 : index
    %c0_71 = arith.constant 0 : index
    %115 = vector.load %arg3[%c1_69, %c0_70, %c0_71] : memref<9x8x8xf32, #tpu.memory_space<vmem>>, vector<1x8x8xf32>
    %116 = vector.shape_cast %115 : vector<1x8x8xf32> to vector<8x8xf32>
    %cst_72 = arith.constant dense<0.000000e+00> : vector<8x512xf32>
    %117 = tpu.matmul %116, %114, %cst_72 {dimension_numbers = #tpu.dot_dimension_numbers<[1], [0], [0], [1], [0, 0, 1, 1], [], []>} : vector<8x8xf32>, vector<8x512xf32>, vector<8x512xf32> -> vector<8x512xf32>
    %118 = arith.addf %110, %117 : vector<8x512xf32>
    %c15_i32_73 = arith.constant 15 : i32
    %119 = tpu.dynamic_rotate %101 by %c15_i32_73 dim 1 : vector<8x512xf32>, i32 -> vector<8x512xf32>
    %c2_74 = arith.constant 2 : index
    %c0_75 = arith.constant 0 : index
    %120 = vector.load %arg1[%c2_74, %c0_75] : memref<8x512xf32, #tpu.memory_space<vmem>>, vector<1x512xf32>
    %121 = vector.broadcast %120 : vector<1x512xf32> to vector<8x512xf32>
    %122 = arith.mulf %119, %121 : vector<8x512xf32>
    %c2_76 = arith.constant 2 : index
    %c0_77 = arith.constant 0 : index
    %c0_78 = arith.constant 0 : index
    %123 = vector.load %arg3[%c2_76, %c0_77, %c0_78] : memref<9x8x8xf32, #tpu.memory_space<vmem>>, vector<1x8x8xf32>
    %124 = vector.shape_cast %123 : vector<1x8x8xf32> to vector<8x8xf32>
    %cst_79 = arith.constant dense<0.000000e+00> : vector<8x512xf32>
    %125 = tpu.matmul %124, %122, %cst_79 {dimension_numbers = #tpu.dot_dimension_numbers<[1], [0], [0], [1], [0, 0, 1, 1], [], []>} : vector<8x8xf32>, vector<8x512xf32>, vector<8x512xf32> -> vector<8x512xf32>
    %126 = arith.addf %118, %125 : vector<8x512xf32>
    %c1_i32_80 = arith.constant 1 : i32
    %127 = tpu.dynamic_rotate %101 by %c1_i32_80 dim 1 : vector<8x512xf32>, i32 -> vector<8x512xf32>
    %c3_81 = arith.constant 3 : index
    %c0_82 = arith.constant 0 : index
    %128 = vector.load %arg1[%c3_81, %c0_82] : memref<8x512xf32, #tpu.memory_space<vmem>>, vector<1x512xf32>
    %129 = vector.broadcast %128 : vector<1x512xf32> to vector<8x512xf32>
    %130 = arith.mulf %127, %129 : vector<8x512xf32>
    %c3_83 = arith.constant 3 : index
    %c0_84 = arith.constant 0 : index
    %c0_85 = arith.constant 0 : index
    %131 = vector.load %arg3[%c3_83, %c0_84, %c0_85] : memref<9x8x8xf32, #tpu.memory_space<vmem>>, vector<1x8x8xf32>
    %132 = vector.shape_cast %131 : vector<1x8x8xf32> to vector<8x8xf32>
    %cst_86 = arith.constant dense<0.000000e+00> : vector<8x512xf32>
    %133 = tpu.matmul %132, %130, %cst_86 {dimension_numbers = #tpu.dot_dimension_numbers<[1], [0], [0], [1], [0, 0, 1, 1], [], []>} : vector<8x8xf32>, vector<8x512xf32>, vector<8x512xf32> -> vector<8x512xf32>
    %134 = arith.addf %126, %133 : vector<8x512xf32>
    %c4_87 = arith.constant 4 : index
    %c0_88 = arith.constant 0 : index
    %c0_89 = arith.constant 0 : index
    %135 = vector.load %arg3[%c4_87, %c0_88, %c0_89] : memref<9x8x8xf32, #tpu.memory_space<vmem>>, vector<1x8x8xf32>
    %136 = vector.shape_cast %135 : vector<1x8x8xf32> to vector<8x8xf32>
    %cst_90 = arith.constant dense<0.000000e+00> : vector<8x512xf32>
    %137 = tpu.matmul %136, %101, %cst_90 {dimension_numbers = #tpu.dot_dimension_numbers<[1], [0], [0], [1], [0, 0, 1, 1], [], []>} : vector<8x8xf32>, vector<8x512xf32>, vector<8x512xf32> -> vector<8x512xf32>
    %138 = arith.addf %134, %137 : vector<8x512xf32>
    %c511_i32_91 = arith.constant 511 : i32
    %139 = tpu.dynamic_rotate %101 by %c511_i32_91 dim 1 : vector<8x512xf32>, i32 -> vector<8x512xf32>
    %c4_92 = arith.constant 4 : index
    %c0_93 = arith.constant 0 : index
    %140 = vector.load %arg1[%c4_92, %c0_93] : memref<8x512xf32, #tpu.memory_space<vmem>>, vector<1x512xf32>
    %141 = vector.broadcast %140 : vector<1x512xf32> to vector<8x512xf32>
    %142 = arith.mulf %139, %141 : vector<8x512xf32>
    %c5_94 = arith.constant 5 : index
    %c0_95 = arith.constant 0 : index
    %c0_96 = arith.constant 0 : index
    %143 = vector.load %arg3[%c5_94, %c0_95, %c0_96] : memref<9x8x8xf32, #tpu.memory_space<vmem>>, vector<1x8x8xf32>
    %144 = vector.shape_cast %143 : vector<1x8x8xf32> to vector<8x8xf32>
    %cst_97 = arith.constant dense<0.000000e+00> : vector<8x512xf32>
    %145 = tpu.matmul %144, %142, %cst_97 {dimension_numbers = #tpu.dot_dimension_numbers<[1], [0], [0], [1], [0, 0, 1, 1], [], []>} : vector<8x8xf32>, vector<8x512xf32>, vector<8x512xf32> -> vector<8x512xf32>
    %146 = arith.addf %138, %145 : vector<8x512xf32>
    %c497_i32_98 = arith.constant 497 : i32
    %147 = tpu.dynamic_rotate %101 by %c497_i32_98 dim 1 : vector<8x512xf32>, i32 -> vector<8x512xf32>
    %c5_99 = arith.constant 5 : index
    %c0_100 = arith.constant 0 : index
    %148 = vector.load %arg1[%c5_99, %c0_100] : memref<8x512xf32, #tpu.memory_space<vmem>>, vector<1x512xf32>
    %149 = vector.broadcast %148 : vector<1x512xf32> to vector<8x512xf32>
    %150 = arith.mulf %147, %149 : vector<8x512xf32>
    %c6_101 = arith.constant 6 : index
    %c0_102 = arith.constant 0 : index
    %c0_103 = arith.constant 0 : index
    %151 = vector.load %arg3[%c6_101, %c0_102, %c0_103] : memref<9x8x8xf32, #tpu.memory_space<vmem>>, vector<1x8x8xf32>
    %152 = vector.shape_cast %151 : vector<1x8x8xf32> to vector<8x8xf32>
    %cst_104 = arith.constant dense<0.000000e+00> : vector<8x512xf32>
    %153 = tpu.matmul %152, %150, %cst_104 {dimension_numbers = #tpu.dot_dimension_numbers<[1], [0], [0], [1], [0, 0, 1, 1], [], []>} : vector<8x8xf32>, vector<8x512xf32>, vector<8x512xf32> -> vector<8x512xf32>
    %154 = arith.addf %146, %153 : vector<8x512xf32>
    %c496_i32_105 = arith.constant 496 : i32
    %155 = tpu.dynamic_rotate %101 by %c496_i32_105 dim 1 : vector<8x512xf32>, i32 -> vector<8x512xf32>
    %c6_106 = arith.constant 6 : index
    %c0_107 = arith.constant 0 : index
    %156 = vector.load %arg1[%c6_106, %c0_107] : memref<8x512xf32, #tpu.memory_space<vmem>>, vector<1x512xf32>
    %157 = vector.broadcast %156 : vector<1x512xf32> to vector<8x512xf32>
    %158 = arith.mulf %155, %157 : vector<8x512xf32>
    %c7_108 = arith.constant 7 : index
    %c0_109 = arith.constant 0 : index
    %c0_110 = arith.constant 0 : index
    %159 = vector.load %arg3[%c7_108, %c0_109, %c0_110] : memref<9x8x8xf32, #tpu.memory_space<vmem>>, vector<1x8x8xf32>
    %160 = vector.shape_cast %159 : vector<1x8x8xf32> to vector<8x8xf32>
    %cst_111 = arith.constant dense<0.000000e+00> : vector<8x512xf32>
    %161 = tpu.matmul %160, %158, %cst_111 {dimension_numbers = #tpu.dot_dimension_numbers<[1], [0], [0], [1], [0, 0, 1, 1], [], []>} : vector<8x8xf32>, vector<8x512xf32>, vector<8x512xf32> -> vector<8x512xf32>
    %162 = arith.addf %154, %161 : vector<8x512xf32>
    %c495_i32_112 = arith.constant 495 : i32
    %163 = tpu.dynamic_rotate %101 by %c495_i32_112 dim 1 : vector<8x512xf32>, i32 -> vector<8x512xf32>
    %c7_113 = arith.constant 7 : index
    %c0_114 = arith.constant 0 : index
    %164 = vector.load %arg1[%c7_113, %c0_114] : memref<8x512xf32, #tpu.memory_space<vmem>>, vector<1x512xf32>
    %165 = vector.broadcast %164 : vector<1x512xf32> to vector<8x512xf32>
    %166 = arith.mulf %163, %165 : vector<8x512xf32>
    %c8_115 = arith.constant 8 : index
    %c0_116 = arith.constant 0 : index
    %c0_117 = arith.constant 0 : index
    %167 = vector.load %arg3[%c8_115, %c0_116, %c0_117] : memref<9x8x8xf32, #tpu.memory_space<vmem>>, vector<1x8x8xf32>
    %168 = vector.shape_cast %167 : vector<1x8x8xf32> to vector<8x8xf32>
    %cst_118 = arith.constant dense<0.000000e+00> : vector<8x512xf32>
    %169 = tpu.matmul %168, %166, %cst_118 {dimension_numbers = #tpu.dot_dimension_numbers<[1], [0], [0], [1], [0, 0, 1, 1], [], []>} : vector<8x8xf32>, vector<8x512xf32>, vector<8x512xf32> -> vector<8x512xf32>
    %170 = arith.addf %162, %169 : vector<8x512xf32>
    %c0_119 = arith.constant 0 : index
    %c0_120 = arith.constant 0 : index
    %171 = vector.load %arg6[%c0_119, %c0_120] : memref<8x1xf32, #tpu.memory_space<vmem>>, vector<8x1xf32>
    %c0_121 = arith.constant 0 : index
    %c0_122 = arith.constant 0 : index
    %172 = vector.load %arg7[%c0_121, %c0_122] : memref<8x1xf32, #tpu.memory_space<vmem>>, vector<8x1xf32>
    %cst_123 = arith.constant dense<0.000000e+00> : vector<8xf32>
    %173 = vector.multi_reduction <add>, %170, %cst_123 [1] : vector<8x512xf32> to vector<8xf32>
    %174 = vector.shape_cast %173 : vector<8xf32> to vector<8x1xf32>
    %cst_124 = arith.constant 0.001953125 : f32
    %175 = vector.broadcast %cst_124 : f32 to vector<8x1xf32>
    %176 = arith.mulf %174, %175 : vector<8x1xf32>
    %177 = arith.mulf %170, %170 : vector<8x512xf32>
    %cst_125 = arith.constant dense<0.000000e+00> : vector<8xf32>
    %178 = vector.multi_reduction <add>, %177, %cst_125 [1] : vector<8x512xf32> to vector<8xf32>
    %179 = vector.shape_cast %178 : vector<8xf32> to vector<8x1xf32>
    %cst_126 = arith.constant 0.001953125 : f32
    %180 = vector.broadcast %cst_126 : f32 to vector<8x1xf32>
    %181 = arith.mulf %179, %180 : vector<8x1xf32>
    %182 = arith.mulf %176, %176 : vector<8x1xf32>
    %183 = arith.subf %181, %182 : vector<8x1xf32>
    %cst_127 = arith.constant 0.000000e+00 : f32
    %184 = vector.broadcast %cst_127 : f32 to vector<8x1xf32>
    %185 = arith.maximumf %183, %184 : vector<8x1xf32>
    %186 = vector.broadcast %176 : vector<8x1xf32> to vector<8x512xf32>
    %187 = arith.subf %170, %186 : vector<8x512xf32>
    %cst_128 = arith.constant 9.99999974E-6 : f32
    %188 = vector.broadcast %cst_128 : f32 to vector<8x1xf32>
    %189 = arith.addf %185, %188 : vector<8x1xf32>
    %190 = math.rsqrt %189 : vector<8x1xf32>
    %191 = arith.mulf %190, %171 : vector<8x1xf32>
    %192 = vector.broadcast %191 : vector<8x1xf32> to vector<8x512xf32>
    %193 = arith.mulf %187, %192 : vector<8x512xf32>
    %194 = vector.broadcast %172 : vector<8x1xf32> to vector<8x512xf32>
    %195 = arith.addf %193, %194 : vector<8x512xf32>
    %196 = arith.addf %195, %74 : vector<8x512xf32>
    %cst_129 = arith.constant 0.000000e+00 : f32
    %197 = vector.broadcast %cst_129 : f32 to vector<8x512xf32>
    %198 = arith.maximumf %196, %197 : vector<8x512xf32>
    %c0_130 = arith.constant 0 : index
    %c0_131 = arith.constant 0 : index
    %199 = vector.load %arg9[%c0_130, %c0_131] : memref<8x512xf32, #tpu.memory_space<vmem>>, vector<8x512xf32>
    tpu.vector_store %arg9[%c0_130, %c0_131], %198 {strides = array<i32>} : memref<8x512xf32, #tpu.memory_space<vmem>>, vector<8x512xf32>,
    return
  }
}

</mosaic_0001>

<llo_original>
// kernel: tpu_custom_call.1
$region0: #{tpu_custom_call.1}
  #allocation0 [shape = 'u32[]', space=smem, size = 0x4, offset = 0x4, fixed_abs, tag = 'smem constant byte address 0x4 - core index']
  #allocation1 [shape = 'u32[72,128]{1,0:T(1,128)}', space=vmem, size = 0x9000, scoped, tag = 'internal scratch']
  %s0 = inlined_call_operand.vmem [shape: f32[8,512], index: 0, kind: input, shape index: {}]
  %s1 = inlined_call_operand.vmem [shape: f32[8,512], index: 1, kind: input, shape index: {}]
  %s2 = inlined_call_operand.vmem [shape: f32[9,16,8], index: 2, kind: input, shape index: {}]
  %s3 = inlined_call_operand.vmem [shape: f32[9,8,8], index: 3, kind: input, shape index: {}]
  %s4 = inlined_call_operand.vmem [shape: f32[8,1], index: 4, kind: input, shape index: {}]
  %s5 = inlined_call_operand.vmem [shape: f32[8,1], index: 5, kind: input, shape index: {}]
  %s6 = inlined_call_operand.vmem [shape: f32[8,1], index: 6, kind: input, shape index: {}]
  %s7 = inlined_call_operand.vmem [shape: f32[8,1], index: 7, kind: input, shape index: {}]
  %s8 = inlined_call_operand.vmem [shape: f32[8,1], index: 8, kind: input, shape index: {}]
  %s9 = inlined_call_operand.hbm [shape: f32[8,512], index: 9, kind: output, shape index: {}]
  %s10 = sld [smem:[#allocation0]]
  $region46: #{tpu_custom_call.1} parent=0
    _
  %s12 = ssub.s32 1, %s10
  %s13 = scalar_select 0, %s12, %s10
  $region1: #{tpu_custom_call.1} parent=0
    #allocation2 [shape = 'u8[16384]{0}', space=vmem, size = 0x4000, scoped, tag = 'output window, operand 0, single buffered']
    #allocation3 [shape = 's32[1]{0}', space=sflag, size = 0x4, scoped, tag = 'scoped memory for tpu_custom_call.1']
    %14 = vsyncpa [#allocation3], 0
    // Predicated region
    $region2: #{tpu_custom_call.1} parent=1 // pred_check
      _
    $region3: #{tpu_custom_call.1} parent=1 // pred_check_branch
      %16 = sbr.rel (0) target = $region5
    $region4: #{tpu_custom_call.1} parent=1 // pred_region
      _
    $region5: #{tpu_custom_call.1} parent=1 // pred_fallthru
      _
    // Predicated region
    $region6: #{tpu_custom_call.1} parent=1 // pred_check
      _
    $region7: #{tpu_custom_call.1} parent=1 // pred_check_branch
      %18 = sbr.rel (0) target = $region9
    $region8: #{tpu_custom_call.1} parent=1 // pred_region
      _
    $region9: #{tpu_custom_call.1} parent=1 // pred_fallthru
      _
    // Predicated region
    $region10: #{tpu_custom_call.1} parent=1 // pred_check
      _
    $region11: #{tpu_custom_call.1} parent=1 // pred_check_branch
      %20 = sbr.rel (0) target = $region13
    $region12: #{tpu_custom_call.1} parent=1 // pred_region
      _
    $region13: #{tpu_custom_call.1} parent=1 // pred_fallthru
      _
    // Predicated region
    $region14: #{tpu_custom_call.1} parent=1 // pred_check
      _
    $region15: #{tpu_custom_call.1} parent=1 // pred_check_branch
      %22 = sbr.rel (0) target = $region17
    $region16: #{tpu_custom_call.1} parent=1 // pred_region
      _
    $region17: #{tpu_custom_call.1} parent=1 // pred_fallthru
      _
    // Predicated region
    $region18: #{tpu_custom_call.1} parent=1 // pred_check
      _
    $region19: #{tpu_custom_call.1} parent=1 // pred_check_branch
      %24 = sbr.rel (0) target = $region21
    $region20: #{tpu_custom_call.1} parent=1 // pred_region
      _
    $region21: #{tpu_custom_call.1} parent=1 // pred_fallthru
      _
    // Predicated region
    $region22: #{tpu_custom_call.1} parent=1 // pred_check
      _
    $region23: #{tpu_custom_call.1} parent=1 // pred_check_branch
      %26 = sbr.rel (0) target = $region25
    $region24: #{tpu_custom_call.1} parent=1 // pred_region
      _
    $region25: #{tpu_custom_call.1} parent=1 // pred_fallthru
      _
    // Predicated region
    $region26: #{tpu_custom_call.1} parent=1 // pred_check
      _
    $region27: #{tpu_custom_call.1} parent=1 // pred_check_branch
      %28 = sbr.rel (0) target = $region29
    $region28: #{tpu_custom_call.1} parent=1 // pred_region
      _
    $region29: #{tpu_custom_call.1} parent=1 // pred_fallthru
      _
    // Predicated region
    $region30: #{tpu_custom_call.1} parent=1 // pred_check
      _
    $region31: #{tpu_custom_call.1} parent=1 // pred_check_branch
      %30 = sbr.rel (0) target = $region33
    $region32: #{tpu_custom_call.1} parent=1 // pred_region
      _
    $region33: #{tpu_custom_call.1} parent=1 // pred_fallthru
      _
    // Predicated region
    $region34: #{tpu_custom_call.1} parent=1 // pred_check
      _
    $region35: #{tpu_custom_call.1} parent=1 // pred_check_branch
      %32 = sbr.rel (0) target = $region37
    $region36: #{tpu_custom_call.1} parent=1 // pred_region
      _
    $region37: #{tpu_custom_call.1} parent=1 // pred_fallthru
      _
    %v33 = vld [vmem:[%s0] sm:$0xff]
    %v34 = vld [vmem:[%s0 + $0x8] sm:$0xff]
    %v35 = vld [vmem:[%s0 + $0x10] sm:$0xff]
    %v36 = vld [vmem:[%s0 + $0x18] sm:$0xff]
    %37 = vrot.lane.b32.xlu0 %v33, 17
    %v38 = vpop.permute.xlu0 %37
    %39 = vrot.lane.b32.xlu0 %v34, 17
    %v40 = vpop.permute.xlu0 %39
    %41 = vrot.lane.b32.xlu0 %v35, 17
    %v42 = vpop.permute.xlu0 %41
    %43 = vrot.lane.b32.xlu0 %v36, 17
    %v44 = vpop.permute.xlu0 %43
    %v45 = vlaneseq
    %v46 = vand.u32 %v45, 127
    %vm47 = vcmp.lt.s32.totalorder %v46, 17
    %v48 = vsel %vm47, %v42, %v44
    %v49 = vsel %vm47, %v40, %v42
    %v50 = vsel %vm47, %v38, %v40
    %v51 = vsel %vm47, %v44, %v38
    %v52 = vld [vmem:[%s1] ss:$8 sm:$0xf]
    %v54 = vperm.slane %v52, 0
    %v55 = vperm.slane %v52, 1
    %v56 = vperm.slane %v52, 2
    %v57 = vperm.slane %v52, 3
    %v62 = vmul.f32 %v51, %v54
    %v63 = vmul.f32 %v50, %v55
    %v64 = vmul.f32 %v49, %v56
    %v65 = vmul.f32 %v48, %v57
    %v66 = vld [vmem:[%s2] sm:$0xff]
    %v67 = vld [vmem:[%s2 + $0x8] sm:$0xff]
    %68 = vrot.lane.b32.xlu0 %v33, 16
    %v69 = vpop.permute.xlu0 %68
    %70 = vrot.lane.b32.xlu0 %v34, 16
    %v71 = vpop.permute.xlu0 %70
    %72 = vrot.lane.b32.xlu0 %v35, 16
    %v73 = vpop.permute.xlu0 %72
    %74 = vrot.lane.b32.xlu0 %v36, 16
    %v75 = vpop.permute.xlu0 %74
    %vm76 = vcmp.lt.s32.totalorder %v46, 16
    %v77 = vsel %vm76, %v73, %v75
    %v78 = vsel %vm76, %v71, %v73
    %v79 = vsel %vm76, %v69, %v71
    %v80 = vsel %vm76, %v75, %v69
    %s81 = scalar_lea.vmem %s1, 1
    %v82 = vld [vmem:[%s81] ss:$8 sm:$0xf]
    %v84 = vperm.slane %v82, 0
    %v85 = vperm.slane %v82, 1
    %v86 = vperm.slane %v82, 2
    %v87 = vperm.slane %v82, 3
    %v92 = vmul.f32 %v80, %v84
    %v93 = vmul.f32 %v79, %v85
    %v94 = vmul.f32 %v78, %v86
    %v95 = vmul.f32 %v77, %v87
    %s96 = scalar_lea.vmem %s2, 16
    %v97 = vld [vmem:[%s96] sm:$0xff]
    %v98 = vld [vmem:[%s96 + $0x8] sm:$0xff]
    %vm99 = vcmask 64512
    %v101 = vsel %vm99, %v97, 0
    %v104 = vsel %vm99, %v98, 0
    %106 = vmatpush.msra.mxu0 0.0
    %107 = vmatpush.msra.mxu0 0.0
    %108 = vmatpush.msra.mxu0 0.0
    %109 = vmatpush.msra.mxu0 0.0
    %110 = vmatpush.msra.mxu0 0.0
    %111 = vmatpush.msra.mxu0 0.0
    %112 = vmatpush.msra.mxu0 0.0
    %113 = vmatpush.msra.mxu0 0.0
    %114 = vmatpush.msra.mxu0 0.0
    %115 = vmatpush.msra.mxu0 0.0
    %116 = vmatpush.msra.mxu0 0.0
    %117 = vmatpush.msra.mxu0 0.0
    %118 = vmatpush.msra.mxu0 0.0
    %119 = vmatpush.msra.mxu0 0.0
    %120 = vmatpush.msra.mxu0 0.0
    %121 = vmatpush.msra.mxu0 %v92
    %122 = vmatmul.f32.gmra.mxu0 %v101
    %v123 = vpop.f32.mrf.mxu0
    %v124 = vadd.f32 0.0, %v123
    %125 = vmatmul.f32.gmra.mxu0 %v104
    %v126 = vpop.f32.mrf.mxu0
    %v127 = vadd.f32 0.0, %v126
    %128 = vdwg.mxu0
    %129 = vmatpush.msra.mxu0 0.0
    %130 = vmatpush.msra.mxu0 0.0
    %131 = vmatpush.msra.mxu0 0.0
    %132 = vmatpush.msra.mxu0 0.0
    %133 = vmatpush.msra.mxu0 0.0
    %134 = vmatpush.msra.mxu0 0.0
    %135 = vmatpush.msra.mxu0 0.0
    %136 = vmatpush.msra.mxu0 0.0
    %137 = vmatpush.msra.mxu0 0.0
    %138 = vmatpush.msra.mxu0 0.0
    %139 = vmatpush.msra.mxu0 0.0
    %140 = vmatpush.msra.mxu0 0.0
    %141 = vmatpush.msra.mxu0 0.0
    %142 = vmatpush.msra.mxu0 0.0
    %143 = vmatpush.msra.mxu0 0.0
    %144 = vmatpush.msra.mxu0 %v93
    %145 = vmatmul.f32.gmra.mxu0 %v101
    %v146 = vpop.f32.mrf.mxu0
    %v147 = vadd.f32 0.0, %v146
    %148 = vmatmul.f32.gmra.mxu0 %v104
    %v149 = vpop.f32.mrf.mxu0
    %v150 = vadd.f32 0.0, %v149
    %151 = vdwg.mxu0
    %152 = vmatpush.msra.mxu0 0.0
    %153 = vmatpush.msra.mxu0 0.0
    %154 = vmatpush.msra.mxu0 0.0
    %155 = vmatpush.msra.mxu0 0.0
    %156 = vmatpush.msra.mxu0 0.0
    %157 = vmatpush.msra.mxu0 0.0
    %158 = vmatpush.msra.mxu0 0.0
    %159 = vmatpush.msra.mxu0 0.0
    %160 = vmatpush.msra.mxu0 0.0
    %161 = vmatpush.msra.mxu0 0.0
    %162 = vmatpush.msra.mxu0 0.0
    %163 = vmatpush.msra.mxu0 0.0
    %164 = vmatpush.msra.mxu0 0.0
    %165 = vmatpush.msra.mxu0 0.0
    %166 = vmatpush.msra.mxu0 0.0
    %167 = vmatpush.msra.mxu0 %v94
    %168 = vmatmul.f32.gmra.mxu0 %v101
    %v169 = vpop.f32.mrf.mxu0
    %v170 = vadd.f32 0.0, %v169
    %171 = vmatmul.f32.gmra.mxu0 %v104
    %v172 = vpop.f32.mrf.mxu0
    %v173 = vadd.f32 0.0, %v172
    %174 = vdwg.mxu0
    %175 = vmatpush.msra.mxu0 0.0
    %176 = vmatpush.msra.mxu0 0.0
    %177 = vmatpush.msra.mxu0 0.0
    %178 = vmatpush.msra.mxu0 0.0
    %179 = vmatpush.msra.mxu0 0.0
    %180 = vmatpush.msra.mxu0 0.0
    %181 = vmatpush.msra.mxu0 0.0
    %182 = vmatpush.msra.mxu0 0.0
    %183 = vmatpush.msra.mxu0 0.0
    %184 = vmatpush.msra.mxu0 0.0
    %185 = vmatpush.msra.mxu0 0.0
    %186 = vmatpush.msra.mxu0 0.0
    %187 = vmatpush.msra.mxu0 0.0
    %188 = vmatpush.msra.mxu0 0.0
    %189 = vmatpush.msra.mxu0 0.0
    %190 = vmatpush.msra.mxu0 %v95
    %191 = vmatmul.f32.gmra.mxu0 %v101
    %v192 = vpop.f32.mrf.mxu0
    %v193 = vadd.f32 0.0, %v192
    %194 = vmatmul.f32.gmra.mxu0 %v104
    %v195 = vpop.f32.mrf.mxu0
    %v196 = vadd.f32 0.0, %v195
    %197 = vdwg.mxu0
    %v199 = vsel %vm99, %v66, 0
    %v202 = vsel %vm99, %v67, 0
    %204 = vmatpush.msra.mxu0 0.0
    %205 = vmatpush.msra.mxu0 0.0
    %206 = vmatpush.msra.mxu0 0.0
    %207 = vmatpush.msra.mxu0 0.0
    %208 = vmatpush.msra.mxu0 0.0
    %209 = vmatpush.msra.mxu0 0.0
    %210 = vmatpush.msra.mxu0 0.0
    %211 = vmatpush.msra.mxu0 0.0
    %212 = vmatpush.msra.mxu0 0.0
    %213 = vmatpush.msra.mxu0 0.0
    %214 = vmatpush.msra.mxu0 0.0
    %215 = vmatpush.msra.mxu0 0.0
    %216 = vmatpush.msra.mxu0 0.0
    %217 = vmatpush.msra.mxu0 0.0
    %218 = vmatpush.msra.mxu0 0.0
    %219 = vmatpush.msra.mxu0 %v62
    %220 = vmatmul.f32.gmra.mxu0 %v199
    %v221 = vpop.f32.mrf.mxu0
    %v222 = vadd.f32 %v124, %v221
    %223 = vmatmul.f32.gmra.mxu0 %v202
    %v224 = vpop.f32.mrf.mxu0
    %v225 = vadd.f32 %v127, %v224
    %226 = vdwg.mxu0
    %227 = vmatpush.msra.mxu0 0.0
    %228 = vmatpush.msra.mxu0 0.0
    %229 = vmatpush.msra.mxu0 0.0
    %230 = vmatpush.msra.mxu0 0.0
    %231 = vmatpush.msra.mxu0 0.0
    %232 = vmatpush.msra.mxu0 0.0
    %233 = vmatpush.msra.mxu0 0.0
    %234 = vmatpush.msra.mxu0 0.0
    %235 = vmatpush.msra.mxu0 0.0
    %236 = vmatpush.msra.mxu0 0.0
    %237 = vmatpush.msra.mxu0 0.0
    %238 = vmatpush.msra.mxu0 0.0
    %239 = vmatpush.msra.mxu0 0.0
    %240 = vmatpush.msra.mxu0 0.0
    %241 = vmatpush.msra.mxu0 0.0
    %242 = vmatpush.msra.mxu0 %v63
    %243 = vmatmul.f32.gmra.mxu0 %v199
    %v244 = vpop.f32.mrf.mxu0
    %v245 = vadd.f32 %v147, %v244
    %246 = vmatmul.f32.gmra.mxu0 %v202
    %v247 = vpop.f32.mrf.mxu0
    %v248 = vadd.f32 %v150, %v247
    %249 = vdwg.mxu0
    %250 = vmatpush.msra.mxu0 0.0
    %251 = vmatpush.msra.mxu0 0.0
    %252 = vmatpush.msra.mxu0 0.0
    %253 = vmatpush.msra.mxu0 0.0
    %254 = vmatpush.msra.mxu0 0.0
    %255 = vmatpush.msra.mxu0 0.0
    %256 = vmatpush.msra.mxu0 0.0
    %257 = vmatpush.msra.mxu0 0.0
    %258 = vmatpush.msra.mxu0 0.0
    %259 = vmatpush.msra.mxu0 0.0
    %260 = vmatpush.msra.mxu0 0.0
    %261 = vmatpush.msra.mxu0 0.0
    %262 = vmatpush.msra.mxu0 0.0
    %263 = vmatpush.msra.mxu0 0.0
    %264 = vmatpush.msra.mxu0 0.0
    %265 = vmatpush.msra.mxu0 %v64
    %266 = vmatmul.f32.gmra.mxu0 %v199
    %v267 = vpop.f32.mrf.mxu0
    %v268 = vadd.f32 %v170, %v267
    %269 = vmatmul.f32.gmra.mxu0 %v202
    %v270 = vpop.f32.mrf.mxu0
    %v271 = vadd.f32 %v173, %v270
    %272 = vdwg.mxu0
    %273 = vmatpush.msra.mxu0 0.0
    %274 = vmatpush.msra.mxu0 0.0
    %275 = vmatpush.msra.mxu0 0.0
    %276 = vmatpush.msra.mxu0 0.0
    %277 = vmatpush.msra.mxu0 0.0
    %278 = vmatpush.msra.mxu0 0.0
    %279 = vmatpush.msra.mxu0 0.0
    %280 = vmatpush.msra.mxu0 0.0
    %281 = vmatpush.msra.mxu0 0.0
    %282 = vmatpush.msra.mxu0 0.0
    %283 = vmatpush.msra.mxu0 0.0
    %284 = vmatpush.msra.mxu0 0.0
    %285 = vmatpush.msra.mxu0 0.0
    %286 = vmatpush.msra.mxu0 0.0
    %287 = vmatpush.msra.mxu0 0.0
    %288 = vmatpush.msra.mxu0 %v65
    %289 = vmatmul.f32.gmra.mxu0 %v199
    %v290 = vpop.f32.mrf.mxu0
    %v291 = vadd.f32 %v193, %v290
    %292 = vmatmul.f32.gmra.mxu0 %v202
    %v293 = vpop.f32.mrf.mxu0
    %v294 = vadd.f32 %v196, %v293
    %295 = vdwg.mxu0
    %296 = vrot.lane.b32.xlu0 %v33, 15
    %v297 = vpop.permute.xlu0 %296
    %298 = vrot.lane.b32.xlu0 %v34, 15
    %v299 = vpop.permute.xlu0 %298
    %300 = vrot.lane.b32.xlu0 %v35, 15
    %v301 = vpop.permute.xlu0 %300
    %302 = vrot.lane.b32.xlu0 %v36, 15
    %v303 = vpop.permute.xlu0 %302
    %vm304 = vcmp.lt.s32.totalorder %v46, 15
    %v305 = vsel %vm304, %v301, %v303
    %v306 = vsel %vm304, %v299, %v301
    %v307 = vsel %vm304, %v297, %v299
    %v308 = vsel %vm304, %v303, %v297
    %s309 = scalar_lea.vmem %s1, 2
    %v310 = vld [vmem:[%s309] ss:$8 sm:$0xf]
    %v312 = vperm.slane %v310, 0
    %v313 = vperm.slane %v310, 1
    %v314 = vperm.slane %v310, 2
    %v315 = vperm.slane %v310, 3
    %v320 = vmul.f32 %v308, %v312
    %v321 = vmul.f32 %v307, %v313
    %v322 = vmul.f32 %v306, %v314
    %v323 = vmul.f32 %v305, %v315
    %s324 = scalar_lea.vmem %s2, 32
    %v325 = vld [vmem:[%s324] sm:$0xff]
    %v326 = vld [vmem:[%s324 + $0x8] sm:$0xff]
    %v328 = vsel %vm99, %v325, 0
    %v331 = vsel %vm99, %v326, 0
    %333 = vmatpush.msra.mxu0 0.0
    %334 = vmatpush.msra.mxu0 0.0
    %335 = vmatpush.msra.mxu0 0.0
    %336 = vmatpush.msra.mxu0 0.0
    %337 = vmatpush.msra.mxu0 0.0
    %338 = vmatpush.msra.mxu0 0.0
    %339 = vmatpush.msra.mxu0 0.0
    %340 = vmatpush.msra.mxu0 0.0
    %341 = vmatpush.msra.mxu0 0.0
    %342 = vmatpush.msra.mxu0 0.0
    %343 = vmatpush.msra.mxu0 0.0
    %344 = vmatpush.msra.mxu0 0.0
    %345 = vmatpush.msra.mxu0 0.0
    %346 = vmatpush.msra.mxu0 0.0
    %347 = vmatpush.msra.mxu0 0.0
    %348 = vmatpush.msra.mxu0 %v320
    %349 = vmatmul.f32.gmra.mxu0 %v328
    %v350 = vpop.f32.mrf.mxu0
    %v351 = vadd.f32 0.0, %v350
    %352 = vmatmul.f32.gmra.mxu0 %v331
    %v353 = vpop.f32.mrf.mxu0
    %v354 = vadd.f32 0.0, %v353
    %355 = vdwg.mxu0
    %356 = vmatpush.msra.mxu0 0.0
    %357 = vmatpush.msra.mxu0 0.0
    %358 = vmatpush.msra.mxu0 0.0
    %359 = vmatpush.msra.mxu0 0.0
    %360 = vmatpush.msra.mxu0 0.0
    %361 = vmatpush.msra.mxu0 0.0
    %362 = vmatpush.msra.mxu0 0.0
    %363 = vmatpush.msra.mxu0 0.0
    %364 = vmatpush.msra.mxu0 0.0
    %365 = vmatpush.msra.mxu0 0.0
    %366 = vmatpush.msra.mxu0 0.0
    %367 = vmatpush.msra.mxu0 0.0
    %368 = vmatpush.msra.mxu0 0.0
    %369 = vmatpush.msra.mxu0 0.0
    %370 = vmatpush.msra.mxu0 0.0
    %371 = vmatpush.msra.mxu0 %v321
    %372 = vmatmul.f32.gmra.mxu0 %v328
    %v373 = vpop.f32.mrf.mxu0
    %v374 = vadd.f32 0.0, %v373
    %375 = vmatmul.f32.gmra.mxu0 %v331
    %v376 = vpop.f32.mrf.mxu0
    %v377 = vadd.f32 0.0, %v376
    %378 = vdwg.mxu0
    %379 = vmatpush.msra.mxu0 0.0
    %380 = vmatpush.msra.mxu0 0.0
    %381 = vmatpush.msra.mxu0 0.0
    %382 = vmatpush.msra.mxu0 0.0
    %383 = vmatpush.msra.mxu0 0.0
    %384 = vmatpush.msra.mxu0 0.0
    %385 = vmatpush.msra.mxu0 0.0
    %386 = vmatpush.msra.mxu0 0.0
    %387 = vmatpush.msra.mxu0 0.0
    %388 = vmatpush.msra.mxu0 0.0
    %389 = vmatpush.msra.mxu0 0.0
    %390 = vmatpush.msra.mxu0 0.0
    %391 = vmatpush.msra.mxu0 0.0
    %392 = vmatpush.msra.mxu0 0.0
    %393 = vmatpush.msra.mxu0 0.0
    %394 = vmatpush.msra.mxu0 %v322
    %395 = vmatmul.f32.gmra.mxu0 %v328
    %v396 = vpop.f32.mrf.mxu0
    %v397 = vadd.f32 0.0, %v396
    %398 = vmatmul.f32.gmra.mxu0 %v331
    %v399 = vpop.f32.mrf.mxu0
    %v400 = vadd.f32 0.0, %v399
    %401 = vdwg.mxu0
    %402 = vmatpush.msra.mxu0 0.0
    %403 = vmatpush.msra.mxu0 0.0
    %404 = vmatpush.msra.mxu0 0.0
    %405 = vmatpush.msra.mxu0 0.0
    %406 = vmatpush.msra.mxu0 0.0
    %407 = vmatpush.msra.mxu0 0.0
    %408 = vmatpush.msra.mxu0 0.0
    %409 = vmatpush.msra.mxu0 0.0
    %410 = vmatpush.msra.mxu0 0.0
    %411 = vmatpush.msra.mxu0 0.0
    %412 = vmatpush.msra.mxu0 0.0
    %413 = vmatpush.msra.mxu0 0.0
    %414 = vmatpush.msra.mxu0 0.0
    %415 = vmatpush.msra.mxu0 0.0
    %416 = vmatpush.msra.mxu0 0.0
    %417 = vmatpush.msra.mxu0 %v323
    %418 = vmatmul.f32.gmra.mxu0 %v328
    %v419 = vpop.f32.mrf.mxu0
    %v420 = vadd.f32 0.0, %v419
    %421 = vmatmul.f32.gmra.mxu0 %v331
    %v422 = vpop.f32.mrf.mxu0
    %v423 = vadd.f32 0.0, %v422
    %424 = vdwg.mxu0
    %v425 = vadd.f32 %v222, %v351
    %v426 = vadd.f32 %v245, %v374
    %v427 = vadd.f32 %v268, %v397
    %v428 = vadd.f32 %v291, %v420
    %v429 = vadd.f32 %v225, %v354
    %v430 = vadd.f32 %v248, %v377
    %v431 = vadd.f32 %v271, %v400
    %v432 = vadd.f32 %v294, %v423
    %433 = vrot.lane.b32.xlu0 %v33, 1
    %v434 = vpop.permute.xlu0 %433
    %435 = vrot.lane.b32.xlu0 %v34, 1
    %v436 = vpop.permute.xlu0 %435
    %437 = vrot.lane.b32.xlu0 %v35, 1
    %v438 = vpop.permute.xlu0 %437
    %439 = vrot.lane.b32.xlu0 %v36, 1
    %v440 = vpop.permute.xlu0 %439
    %vm441 = vcmp.lt.s32.totalorder %v46, 1
    %v442 = vsel %vm441, %v438, %v440
    %v443 = vsel %vm441, %v436, %v438
    %v444 = vsel %vm441, %v434, %v436
    %v445 = vsel %vm441, %v440, %v434
    %s446 = scalar_lea.vmem %s1, 3
    %v447 = vld [vmem:[%s446] ss:$8 sm:$0xf]
    %v449 = vperm.slane %v447, 0
    %v450 = vperm.slane %v447, 1
    %v451 = vperm.slane %v447, 2
    %v452 = vperm.slane %v447, 3
    %v457 = vmul.f32 %v445, %v449
    %v458 = vmul.f32 %v444, %v450
    %v459 = vmul.f32 %v443, %v451
    %v460 = vmul.f32 %v442, %v452
    %s461 = scalar_lea.vmem %s2, 48
    %v462 = vld [vmem:[%s461] sm:$0xff]
    %v463 = vld [vmem:[%s461 + $0x8] sm:$0xff]
    %v465 = vsel %vm99, %v462, 0
    %v468 = vsel %vm99, %v463, 0
    %470 = vmatpush.msra.mxu0 0.0
    %471 = vmatpush.msra.mxu0 0.0
    %472 = vmatpush.msra.mxu0 0.0
    %473 = vmatpush.msra.mxu0 0.0
    %474 = vmatpush.msra.mxu0 0.0
    %475 = vmatpush.msra.mxu0 0.0
    %476 = vmatpush.msra.mxu0 0.0
    %477 = vmatpush.msra.mxu0 0.0
    %478 = vmatpush.msra.mxu0 0.0
    %479 = vmatpush.msra.mxu0 0.0
    %480 = vmatpush.msra.mxu0 0.0
    %481 = vmatpush.msra.mxu0 0.0
    %482 = vmatpush.msra.mxu0 0.0
    %483 = vmatpush.msra.mxu0 0.0
    %484 = vmatpush.msra.mxu0 0.0
    %485 = vmatpush.msra.mxu0 %v457
    %486 = vmatmul.f32.gmra.mxu0 %v465
    %v487 = vpop.f32.mrf.mxu0
    %v488 = vadd.f32 0.0, %v487
    %489 = vmatmul.f32.gmra.mxu0 %v468
    %v490 = vpop.f32.mrf.mxu0
    %v491 = vadd.f32 0.0, %v490
    %492 = vdwg.mxu0
    %493 = vmatpush.msra.mxu0 0.0
    %494 = vmatpush.msra.mxu0 0.0
    %495 = vmatpush.msra.mxu0 0.0
    %496 = vmatpush.msra.mxu0 0.0
    %497 = vmatpush.msra.mxu0 0.0
    %498 = vmatpush.msra.mxu0 0.0
    %499 = vmatpush.msra.mxu0 0.0
    %500 = vmatpush.msra.mxu0 0.0
    %501 = vmatpush.msra.mxu0 0.0
    %502 = vmatpush.msra.mxu0 0.0
    %503 = vmatpush.msra.mxu0 0.0
    %504 = vmatpush.msra.mxu0 0.0
    %505 = vmatpush.msra.mxu0 0.0
    %506 = vmatpush.msra.mxu0 0.0
    %507 = vmatpush.msra.mxu0 0.0
    %508 = vmatpush.msra.mxu0 %v458
    %509 = vmatmul.f32.gmra.mxu0 %v465
    %v510 = vpop.f32.mrf.mxu0
    %v511 = vadd.f32 0.0, %v510
    %512 = vmatmul.f32.gmra.mxu0 %v468
    %v513 = vpop.f32.mrf.mxu0
    %v514 = vadd.f32 0.0, %v513
    %515 = vdwg.mxu0
    %516 = vmatpush.msra.mxu0 0.0
    %517 = vmatpush.msra.mxu0 0.0
    %518 = vmatpush.msra.mxu0 0.0
    %519 = vmatpush.msra.mxu0 0.0
    %520 = vmatpush.msra.mxu0 0.0
    %521 = vmatpush.msra.mxu0 0.0
    %522 = vmatpush.msra.mxu0 0.0
    %523 = vmatpush.msra.mxu0 0.0
    %524 = vmatpush.msra.mxu0 0.0
    %525 = vmatpush.msra.mxu0 0.0
    %526 = vmatpush.msra.mxu0 0.0
    %527 = vmatpush.msra.mxu0 0.0
    %528 = vmatpush.msra.mxu0 0.0
    %529 = vmatpush.msra.mxu0 0.0
    %530 = vmatpush.msra.mxu0 0.0
    %531 = vmatpush.msra.mxu0 %v459
    %532 = vmatmul.f32.gmra.mxu0 %v465
    %v533 = vpop.f32.mrf.mxu0
    %v534 = vadd.f32 0.0, %v533
    %535 = vmatmul.f32.gmra.mxu0 %v468
    %v536 = vpop.f32.mrf.mxu0
    %v537 = vadd.f32 0.0, %v536
    %538 = vdwg.mxu0
    %539 = vmatpush.msra.mxu0 0.0
    %540 = vmatpush.msra.mxu0 0.0
    %541 = vmatpush.msra.mxu0 0.0
    %542 = vmatpush.msra.mxu0 0.0
    %543 = vmatpush.msra.mxu0 0.0
    %544 = vmatpush.msra.mxu0 0.0
    %545 = vmatpush.msra.mxu0 0.0
    %546 = vmatpush.msra.mxu0 0.0
    %547 = vmatpush.msra.mxu0 0.0
    %548 = vmatpush.msra.mxu0 0.0
    %549 = vmatpush.msra.mxu0 0.0
    %550 = vmatpush.msra.mxu0 0.0
    %551 = vmatpush.msra.mxu0 0.0
    %552 = vmatpush.msra.mxu0 0.0
    %553 = vmatpush.msra.mxu0 0.0
    %554 = vmatpush.msra.mxu0 %v460
    %555 = vmatmul.f32.gmra.mxu0 %v465
    %v556 = vpop.f32.mrf.mxu0
    %v557 = vadd.f32 0.0, %v556
    %558 = vmatmul.f32.gmra.mxu0 %v468
    %v559 = vpop.f32.mrf.mxu0
    %v560 = vadd.f32 0.0, %v559
    %561 = vdwg.mxu0
    %v562 = vadd.f32 %v425, %v488
    %v563 = vadd.f32 %v426, %v511
    %v564 = vadd.f32 %v427, %v534
    %v565 = vadd.f32 %v428, %v557
    %v566 = vadd.f32 %v429, %v491
    %v567 = vadd.f32 %v430, %v514
    %v568 = vadd.f32 %v431, %v537
    %v569 = vadd.f32 %v432, %v560
    %s570 = scalar_lea.vmem %s2, 64
    %v571 = vld [vmem:[%s570] sm:$0xff]
    %v572 = vld [vmem:[%s570 + $0x8] sm:$0xff]
    %v574 = vsel %vm99, %v571, 0
    %v577 = vsel %vm99, %v572, 0
    %579 = vmatpush.msra.mxu0 0.0
    %580 = vmatpush.msra.mxu0 0.0
    %581 = vmatpush.msra.mxu0 0.0
    %582 = vmatpush.msra.mxu0 0.0
    %583 = vmatpush.msra.mxu0 0.0
    %584 = vmatpush.msra.mxu0 0.0
    %585 = vmatpush.msra.mxu0 0.0
    %586 = vmatpush.msra.mxu0 0.0
    %587 = vmatpush.msra.mxu0 0.0
    %588 = vmatpush.msra.mxu0 0.0
    %589 = vmatpush.msra.mxu0 0.0
    %590 = vmatpush.msra.mxu0 0.0
    %591 = vmatpush.msra.mxu0 0.0
    %592 = vmatpush.msra.mxu0 0.0
    %593 = vmatpush.msra.mxu0 0.0
    %594 = vmatpush.msra.mxu0 %v33
    %595 = vmatmul.f32.gmra.mxu0 %v574
    %v596 = vpop.f32.mrf.mxu0
    %v597 = vadd.f32 0.0, %v596
    %598 = vmatmul.f32.gmra.mxu0 %v577
    %v599 = vpop.f32.mrf.mxu0
    %v600 = vadd.f32 0.0, %v599
    %601 = vdwg.mxu0
    %602 = vmatpush.msra.mxu0 0.0
    %603 = vmatpush.msra.mxu0 0.0
    %604 = vmatpush.msra.mxu0 0.0
    %605 = vmatpush.msra.mxu0 0.0
    %606 = vmatpush.msra.mxu0 0.0
    %607 = vmatpush.msra.mxu0 0.0
    %608 = vmatpush.msra.mxu0 0.0
    %609 = vmatpush.msra.mxu0 0.0
    %610 = vmatpush.msra.mxu0 0.0
    %611 = vmatpush.msra.mxu0 0.0
    %612 = vmatpush.msra.mxu0 0.0
    %613 = vmatpush.msra.mxu0 0.0
    %614 = vmatpush.msra.mxu0 0.0
    %615 = vmatpush.msra.mxu0 0.0
    %616 = vmatpush.msra.mxu0 0.0
    %617 = vmatpush.msra.mxu0 %v34
    %618 = vmatmul.f32.gmra.mxu0 %v574
    %v619 = vpop.f32.mrf.mxu0
    %v620 = vadd.f32 0.0, %v619
    %621 = vmatmul.f32.gmra.mxu0 %v577
    %v622 = vpop.f32.mrf.mxu0
    %v623 = vadd.f32 0.0, %v622
    %624 = vdwg.mxu0
    %625 = vmatpush.msra.mxu0 0.0
    %626 = vmatpush.msra.mxu0 0.0
    %627 = vmatpush.msra.mxu0 0.0
    %628 = vmatpush.msra.mxu0 0.0
    %629 = vmatpush.msra.mxu0 0.0
    %630 = vmatpush.msra.mxu0 0.0
    %631 = vmatpush.msra.mxu0 0.0
    %632 = vmatpush.msra.mxu0 0.0
    %633 = vmatpush.msra.mxu0 0.0
    %634 = vmatpush.msra.mxu0 0.0
    %635 = vmatpush.msra.mxu0 0.0
    %636 = vmatpush.msra.mxu0 0.0
    %637 = vmatpush.msra.mxu0 0.0
    %638 = vmatpush.msra.mxu0 0.0
    %639 = vmatpush.msra.mxu0 0.0
    %640 = vmatpush.msra.mxu0 %v35
    %641 = vmatmul.f32.gmra.mxu0 %v574
    %v642 = vpop.f32.mrf.mxu0
    %v643 = vadd.f32 0.0, %v642
    %644 = vmatmul.f32.gmra.mxu0 %v577
    %v645 = vpop.f32.mrf.mxu0
    %v646 = vadd.f32 0.0, %v645
    %647 = vdwg.mxu0
    %648 = vmatpush.msra.mxu0 0.0
    %649 = vmatpush.msra.mxu0 0.0
    %650 = vmatpush.msra.mxu0 0.0
    %651 = vmatpush.msra.mxu0 0.0
    %652 = vmatpush.msra.mxu0 0.0
    %653 = vmatpush.msra.mxu0 0.0
    %654 = vmatpush.msra.mxu0 0.0
    %655 = vmatpush.msra.mxu0 0.0
    %656 = vmatpush.msra.mxu0 0.0
    %657 = vmatpush.msra.mxu0 0.0
    %658 = vmatpush.msra.mxu0 0.0
    %659 = vmatpush.msra.mxu0 0.0
    %660 = vmatpush.msra.mxu0 0.0
    %661 = vmatpush.msra.mxu0 0.0
    %662 = vmatpush.msra.mxu0 0.0
    %663 = vmatpush.msra.mxu0 %v36
    %664 = vmatmul.f32.gmra.mxu0 %v574
    %v665 = vpop.f32.mrf.mxu0
    %v666 = vadd.f32 0.0, %v665
    %667 = vmatmul.f32.gmra.mxu0 %v577
    %v668 = vpop.f32.mrf.mxu0
    %v669 = vadd.f32 0.0, %v668
    %670 = vdwg.mxu0
    %v671 = vadd.f32 %v562, %v597
    %v672 = vadd.f32 %v563, %v620
    %v673 = vadd.f32 %v564, %v643
    %v674 = vadd.f32 %v565, %v666
    %v675 = vadd.f32 %v566, %v600
    %v676 = vadd.f32 %v567, %v623
    %v677 = vadd.f32 %v568, %v646
    %v678 = vadd.f32 %v569, %v669
    %679 = vrot.lane.b32.xlu0 %v33, 127
    %v680 = vpop.permute.xlu0 %679
    %681 = vrot.lane.b32.xlu0 %v34, 127
    %v682 = vpop.permute.xlu0 %681
    %683 = vrot.lane.b32.xlu0 %v35, 127
    %v684 = vpop.permute.xlu0 %683
    %685 = vrot.lane.b32.xlu0 %v36, 127
    %v686 = vpop.permute.xlu0 %685
    %vm687 = vcmp.lt.s32.totalorder %v46, 127
    %v688 = vsel %vm687, %v684, %v686
    %v689 = vsel %vm687, %v682, %v684
    %v690 = vsel %vm687, %v680, %v682
    %v691 = vsel %vm687, %v686, %v680
    %s692 = scalar_lea.vmem %s1, 4
    %v693 = vld [vmem:[%s692] ss:$8 sm:$0xf]
    %v695 = vperm.slane %v693, 0
    %v696 = vperm.slane %v693, 1
    %v697 = vperm.slane %v693, 2
    %v698 = vperm.slane %v693, 3
    %v703 = vmul.f32 %v690, %v695
    %v704 = vmul.f32 %v689, %v696
    %v705 = vmul.f32 %v688, %v697
    %v706 = vmul.f32 %v691, %v698
    %s707 = scalar_lea.vmem %s2, 80
    %v708 = vld [vmem:[%s707] sm:$0xff]
    %v709 = vld [vmem:[%s707 + $0x8] sm:$0xff]
    %v711 = vsel %vm99, %v708, 0
    %v714 = vsel %vm99, %v709, 0
    %716 = vmatpush.msra.mxu0 0.0
    %717 = vmatpush.msra.mxu0 0.0
    %718 = vmatpush.msra.mxu0 0.0
    %719 = vmatpush.msra.mxu0 0.0
    %720 = vmatpush.msra.mxu0 0.0
    %721 = vmatpush.msra.mxu0 0.0
    %722 = vmatpush.msra.mxu0 0.0
    %723 = vmatpush.msra.mxu0 0.0
    %724 = vmatpush.msra.mxu0 0.0
    %725 = vmatpush.msra.mxu0 0.0
    %726 = vmatpush.msra.mxu0 0.0
    %727 = vmatpush.msra.mxu0 0.0
    %728 = vmatpush.msra.mxu0 0.0
    %729 = vmatpush.msra.mxu0 0.0
    %730 = vmatpush.msra.mxu0 0.0
    %731 = vmatpush.msra.mxu0 %v703
    %732 = vmatmul.f32.gmra.mxu0 %v711
    %v733 = vpop.f32.mrf.mxu0
    %v734 = vadd.f32 0.0, %v733
    %735 = vmatmul.f32.gmra.mxu0 %v714
    %v736 = vpop.f32.mrf.mxu0
    %v737 = vadd.f32 0.0, %v736
    %738 = vdwg.mxu0
    %739 = vmatpush.msra.mxu0 0.0
    %740 = vmatpush.msra.mxu0 0.0
    %741 = vmatpush.msra.mxu0 0.0
    %742 = vmatpush.msra.mxu0 0.0
    %743 = vmatpush.msra.mxu0 0.0
    %744 = vmatpush.msra.mxu0 0.0
    %745 = vmatpush.msra.mxu0 0.0
    %746 = vmatpush.msra.mxu0 0.0
    %747 = vmatpush.msra.mxu0 0.0
    %748 = vmatpush.msra.mxu0 0.0
    %749 = vmatpush.msra.mxu0 0.0
    %750 = vmatpush.msra.mxu0 0.0
    %751 = vmatpush.msra.mxu0 0.0
    %752 = vmatpush.msra.mxu0 0.0
    %753 = vmatpush.msra.mxu0 0.0
    %754 = vmatpush.msra.mxu0 %v704
    %755 = vmatmul.f32.gmra.mxu0 %v711
    %v756 = vpop.f32.mrf.mxu0
    %v757 = vadd.f32 0.0, %v756
    %758 = vmatmul.f32.gmra.mxu0 %v714
    %v759 = vpop.f32.mrf.mxu0
    %v760 = vadd.f32 0.0, %v759
    %761 = vdwg.mxu0
    %762 = vmatpush.msra.mxu0 0.0
    %763 = vmatpush.msra.mxu0 0.0
    %764 = vmatpush.msra.mxu0 0.0
    %765 = vmatpush.msra.mxu0 0.0
    %766 = vmatpush.msra.mxu0 0.0
    %767 = vmatpush.msra.mxu0 0.0
    %768 = vmatpush.msra.mxu0 0.0
    %769 = vmatpush.msra.mxu0 0.0
    %770 = vmatpush.msra.mxu0 0.0
    %771 = vmatpush.msra.mxu0 0.0
    %772 = vmatpush.msra.mxu0 0.0
    %773 = vmatpush.msra.mxu0 0.0
    %774 = vmatpush.msra.mxu0 0.0
    %775 = vmatpush.msra.mxu0 0.0
    %776 = vmatpush.msra.mxu0 0.0
    %777 = vmatpush.msra.mxu0 %v705
    %778 = vmatmul.f32.gmra.mxu0 %v711
    %v779 = vpop.f32.mrf.mxu0
    %v780 = vadd.f32 0.0, %v779
    %781 = vmatmul.f32.gmra.mxu0 %v714
    %v782 = vpop.f32.mrf.mxu0
    %v783 = vadd.f32 0.0, %v782
    %784 = vdwg.mxu0
    %785 = vmatpush.msra.mxu0 0.0
    %786 = vmatpush.msra.mxu0 0.0
    %787 = vmatpush.msra.mxu0 0.0
    %788 = vmatpush.msra.mxu0 0.0
    %789 = vmatpush.msra.mxu0 0.0
    %790 = vmatpush.msra.mxu0 0.0
    %791 = vmatpush.msra.mxu0 0.0
    %792 = vmatpush.msra.mxu0 0.0
    %793 = vmatpush.msra.mxu0 0.0
    %794 = vmatpush.msra.mxu0 0.0
    %795 = vmatpush.msra.mxu0 0.0
    %796 = vmatpush.msra.mxu0 0.0
    %797 = vmatpush.msra.mxu0 0.0
    %798 = vmatpush.msra.mxu0 0.0
    %799 = vmatpush.msra.mxu0 0.0
    %800 = vmatpush.msra.mxu0 %v706
    %801 = vmatmul.f32.gmra.mxu0 %v711
    %v802 = vpop.f32.mrf.mxu0
    %v803 = vadd.f32 0.0, %v802
    %804 = vmatmul.f32.gmra.mxu0 %v714
    %v805 = vpop.f32.mrf.mxu0
    %v806 = vadd.f32 0.0, %v805
    %807 = vdwg.mxu0
    %v808 = vadd.f32 %v671, %v734
    %v809 = vadd.f32 %v672, %v757
    %v810 = vadd.f32 %v673, %v780
    %v811 = vadd.f32 %v674, %v803
    %v812 = vadd.f32 %v675, %v737
    %v813 = vadd.f32 %v676, %v760
    %v814 = vadd.f32 %v677, %v783
    %v815 = vadd.f32 %v678, %v806
    %816 = vrot.lane.b32.xlu0 %v33, 113
    %v817 = vpop.permute.xlu0 %816
    %818 = vrot.lane.b32.xlu0 %v34, 113
    %v819 = vpop.permute.xlu0 %818
    %820 = vrot.lane.b32.xlu0 %v35, 113
    %v821 = vpop.permute.xlu0 %820
    %822 = vrot.lane.b32.xlu0 %v36, 113
    %v823 = vpop.permute.xlu0 %822
    %vm824 = vcmp.lt.s32.totalorder %v46, 113
    %v825 = vsel %vm824, %v821, %v823
    %v826 = vsel %vm824, %v819, %v821
    %v827 = vsel %vm824, %v817, %v819
    %v828 = vsel %vm824, %v823, %v817
    %s829 = scalar_lea.vmem %s1, 5
    %v830 = vld [vmem:[%s829] ss:$8 sm:$0xf]
    %v832 = vperm.slane %v830, 0
    %v833 = vperm.slane %v830, 1
    %v834 = vperm.slane %v830, 2
    %v835 = vperm.slane %v830, 3
    %v840 = vmul.f32 %v827, %v832
    %v841 = vmul.f32 %v826, %v833
    %v842 = vmul.f32 %v825, %v834
    %v843 = vmul.f32 %v828, %v835
    %s844 = scalar_lea.vmem %s2, 96
    %v845 = vld [vmem:[%s844] sm:$0xff]
    %v846 = vld [vmem:[%s844 + $0x8] sm:$0xff]
    %v848 = vsel %vm99, %v845, 0
    %v851 = vsel %vm99, %v846, 0
    %853 = vmatpush.msra.mxu0 0.0
    %854 = vmatpush.msra.mxu0 0.0
    %855 = vmatpush.msra.mxu0 0.0
    %856 = vmatpush.msra.mxu0 0.0
    %857 = vmatpush.msra.mxu0 0.0
    %858 = vmatpush.msra.mxu0 0.0
    %859 = vmatpush.msra.mxu0 0.0
    %860 = vmatpush.msra.mxu0 0.0
    %861 = vmatpush.msra.mxu0 0.0
    %862 = vmatpush.msra.mxu0 0.0
    %863 = vmatpush.msra.mxu0 0.0
    %864 = vmatpush.msra.mxu0 0.0
    %865 = vmatpush.msra.mxu0 0.0
    %866 = vmatpush.msra.mxu0 0.0
    %867 = vmatpush.msra.mxu0 0.0
    %868 = vmatpush.msra.mxu0 %v840
    %869 = vmatmul.f32.gmra.mxu0 %v848
    %v870 = vpop.f32.mrf.mxu0
    %v871 = vadd.f32 0.0, %v870
    %872 = vmatmul.f32.gmra.mxu0 %v851
    %v873 = vpop.f32.mrf.mxu0
    %v874 = vadd.f32 0.0, %v873
    %875 = vdwg.mxu0
    %876 = vmatpush.msra.mxu0 0.0
    %877 = vmatpush.msra.mxu0 0.0
    %878 = vmatpush.msra.mxu0 0.0
    %879 = vmatpush.msra.mxu0 0.0
    %880 = vmatpush.msra.mxu0 0.0
    %881 = vmatpush.msra.mxu0 0.0
    %882 = vmatpush.msra.mxu0 0.0
    %883 = vmatpush.msra.mxu0 0.0
    %884 = vmatpush.msra.mxu0 0.0
    %885 = vmatpush.msra.mxu0 0.0
    %886 = vmatpush.msra.mxu0 0.0
    %887 = vmatpush.msra.mxu0 0.0
    %888 = vmatpush.msra.mxu0 0.0
    %889 = vmatpush.msra.mxu0 0.0
    %890 = vmatpush.msra.mxu0 0.0
    %891 = vmatpush.msra.mxu0 %v841
    %892 = vmatmul.f32.gmra.mxu0 %v848
    %v893 = vpop.f32.mrf.mxu0
    %v894 = vadd.f32 0.0, %v893
    %895 = vmatmul.f32.gmra.mxu0 %v851
    %v896 = vpop.f32.mrf.mxu0
    %v897 = vadd.f32 0.0, %v896
    %898 = vdwg.mxu0
    %899 = vmatpush.msra.mxu0 0.0
    %900 = vmatpush.msra.mxu0 0.0
    %901 = vmatpush.msra.mxu0 0.0
    %902 = vmatpush.msra.mxu0 0.0
    %903 = vmatpush.msra.mxu0 0.0
    %904 = vmatpush.msra.mxu0 0.0
    %905 = vmatpush.msra.mxu0 0.0
    %906 = vmatpush.msra.mxu0 0.0
    %907 = vmatpush.msra.mxu0 0.0
    %908 = vmatpush.msra.mxu0 0.0
    %909 = vmatpush.msra.mxu0 0.0
    %910 = vmatpush.msra.mxu0 0.0
    %911 = vmatpush.msra.mxu0 0.0
    %912 = vmatpush.msra.mxu0 0.0
    %913 = vmatpush.msra.mxu0 0.0
    %914 = vmatpush.msra.mxu0 %v842
    %915 = vmatmul.f32.gmra.mxu0 %v848
    %v916 = vpop.f32.mrf.mxu0
    %v917 = vadd.f32 0.0, %v916
    %918 = vmatmul.f32.gmra.mxu0 %v851
    %v919 = vpop.f32.mrf.mxu0
    %v920 = vadd.f32 0.0, %v919
    %921 = vdwg.mxu0
    %922 = vmatpush.msra.mxu0 0.0
    %923 = vmatpush.msra.mxu0 0.0
    %924 = vmatpush.msra.mxu0 0.0
    %925 = vmatpush.msra.mxu0 0.0
    %926 = vmatpush.msra.mxu0 0.0
    %927 = vmatpush.msra.mxu0 0.0
    %928 = vmatpush.msra.mxu0 0.0
    %929 = vmatpush.msra.mxu0 0.0
    %930 = vmatpush.msra.mxu0 0.0
    %931 = vmatpush.msra.mxu0 0.0
    %932 = vmatpush.msra.mxu0 0.0
    %933 = vmatpush.msra.mxu0 0.0
    %934 = vmatpush.msra.mxu0 0.0
    %935 = vmatpush.msra.mxu0 0.0
    %936 = vmatpush.msra.mxu0 0.0
    %937 = vmatpush.msra.mxu0 %v843
    %938 = vmatmul.f32.gmra.mxu0 %v848
    %v939 = vpop.f32.mrf.mxu0
    %v940 = vadd.f32 0.0, %v939
    %941 = vmatmul.f32.gmra.mxu0 %v851
    %v942 = vpop.f32.mrf.mxu0
    %v943 = vadd.f32 0.0, %v942
    %944 = vdwg.mxu0
    %v945 = vadd.f32 %v808, %v871
    %v946 = vadd.f32 %v809, %v894
    %v947 = vadd.f32 %v810, %v917
    %v948 = vadd.f32 %v811, %v940
    %v949 = vadd.f32 %v812, %v874
    %v950 = vadd.f32 %v813, %v897
    %v951 = vadd.f32 %v814, %v920
    %v952 = vadd.f32 %v815, %v943
    %953 = vrot.lane.b32.xlu0 %v33, 112
    %v954 = vpop.permute.xlu0 %953
    %955 = vrot.lane.b32.xlu0 %v34, 112
    %v956 = vpop.permute.xlu0 %955
    %957 = vrot.lane.b32.xlu0 %v35, 112
    %v958 = vpop.permute.xlu0 %957
    %959 = vrot.lane.b32.xlu0 %v36, 112
    %v960 = vpop.permute.xlu0 %959
    %vm961 = vcmp.lt.s32.totalorder %v46, 112
    %v962 = vsel %vm961, %v958, %v960
    %v963 = vsel %vm961, %v956, %v958
    %v964 = vsel %vm961, %v954, %v956
    %v965 = vsel %vm961, %v960, %v954
    %s966 = scalar_lea.vmem %s1, 6
    %v967 = vld [vmem:[%s966] ss:$8 sm:$0xf]
    %v969 = vperm.slane %v967, 0
    %v970 = vperm.slane %v967, 1
    %v971 = vperm.slane %v967, 2
    %v972 = vperm.slane %v967, 3
    %v977 = vmul.f32 %v964, %v969
    %v978 = vmul.f32 %v963, %v970
    %v979 = vmul.f32 %v962, %v971
    %v980 = vmul.f32 %v965, %v972
    %s981 = scalar_lea.vmem %s2, 112
    %v982 = vld [vmem:[%s981] sm:$0xff]
    %v983 = vld [vmem:[%s981 + $0x8] sm:$0xff]
    %v985 = vsel %vm99, %v982, 0
    %v988 = vsel %vm99, %v983, 0
    %990 = vmatpush.msra.mxu0 0.0
    %991 = vmatpush.msra.mxu0 0.0
    %992 = vmatpush.msra.mxu0 0.0
    %993 = vmatpush.msra.mxu0 0.0
    %994 = vmatpush.msra.mxu0 0.0
    %995 = vmatpush.msra.mxu0 0.0
    %996 = vmatpush.msra.mxu0 0.0
    %997 = vmatpush.msra.mxu0 0.0
    %998 = vmatpush.msra.mxu0 0.0
    %999 = vmatpush.msra.mxu0 0.0
    %1000 = vmatpush.msra.mxu0 0.0
    %1001 = vmatpush.msra.mxu0 0.0
    %1002 = vmatpush.msra.mxu0 0.0
    %1003 = vmatpush.msra.mxu0 0.0
    %1004 = vmatpush.msra.mxu0 0.0
    %1005 = vmatpush.msra.mxu0 %v977
    %1006 = vmatmul.f32.gmra.mxu0 %v985
    %v1007 = vpop.f32.mrf.mxu0
    %v1008 = vadd.f32 0.0, %v1007
    %1009 = vmatmul.f32.gmra.mxu0 %v988
    %v1010 = vpop.f32.mrf.mxu0
    %v1011 = vadd.f32 0.0, %v1010
    %1012 = vdwg.mxu0
    %1013 = vmatpush.msra.mxu0 0.0
    %1014 = vmatpush.msra.mxu0 0.0
    %1015 = vmatpush.msra.mxu0 0.0
    %1016 = vmatpush.msra.mxu0 0.0
    %1017 = vmatpush.msra.mxu0 0.0
    %1018 = vmatpush.msra.mxu0 0.0
    %1019 = vmatpush.msra.mxu0 0.0
    %1020 = vmatpush.msra.mxu0 0.0
    %1021 = vmatpush.msra.mxu0 0.0
    %1022 = vmatpush.msra.mxu0 0.0
    %1023 = vmatpush.msra.mxu0 0.0
    %1024 = vmatpush.msra.mxu0 0.0
    %1025 = vmatpush.msra.mxu0 0.0
    %1026 = vmatpush.msra.mxu0 0.0
    %1027 = vmatpush.msra.mxu0 0.0
    %1028 = vmatpush.msra.mxu0 %v978
    %1029 = vmatmul.f32.gmra.mxu0 %v985
    %v1030 = vpop.f32.mrf.mxu0
    %v1031 = vadd.f32 0.0, %v1030
    %1032 = vmatmul.f32.gmra.mxu0 %v988
    %v1033 = vpop.f32.mrf.mxu0
    %v1034 = vadd.f32 0.0, %v1033
    %1035 = vdwg.mxu0
    %1036 = vmatpush.msra.mxu0 0.0
    %1037 = vmatpush.msra.mxu0 0.0
    %1038 = vmatpush.msra.mxu0 0.0
    %1039 = vmatpush.msra.mxu0 0.0
    %1040 = vmatpush.msra.mxu0 0.0
    %1041 = vmatpush.msra.mxu0 0.0
    %1042 = vmatpush.msra.mxu0 0.0
    %1043 = vmatpush.msra.mxu0 0.0
    %1044 = vmatpush.msra.mxu0 0.0
    %1045 = vmatpush.msra.mxu0 0.0
    %1046 = vmatpush.msra.mxu0 0.0
    %1047 = vmatpush.msra.mxu0 0.0
    %1048 = vmatpush.msra.mxu0 0.0
    %1049 = vmatpush.msra.mxu0 0.0
    %1050 = vmatpush.msra.mxu0 0.0
    %1051 = vmatpush.msra.mxu0 %v979
    %1052 = vmatmul.f32.gmra.mxu0 %v985
    %v1053 = vpop.f32.mrf.mxu0
    %v1054 = vadd.f32 0.0, %v1053
    %1055 = vmatmul.f32.gmra.mxu0 %v988
    %v1056 = vpop.f32.mrf.mxu0
    %v1057 = vadd.f32 0.0, %v1056
    %1058 = vdwg.mxu0
    %1059 = vmatpush.msra.mxu0 0.0
    %1060 = vmatpush.msra.mxu0 0.0
    %1061 = vmatpush.msra.mxu0 0.0
    %1062 = vmatpush.msra.mxu0 0.0
    %1063 = vmatpush.msra.mxu0 0.0
    %1064 = vmatpush.msra.mxu0 0.0
    %1065 = vmatpush.msra.mxu0 0.0
    %1066 = vmatpush.msra.mxu0 0.0
    %1067 = vmatpush.msra.mxu0 0.0
    %1068 = vmatpush.msra.mxu0 0.0
    %1069 = vmatpush.msra.mxu0 0.0
    %1070 = vmatpush.msra.mxu0 0.0
    %1071 = vmatpush.msra.mxu0 0.0
    %1072 = vmatpush.msra.mxu0 0.0
    %1073 = vmatpush.msra.mxu0 0.0
    %1074 = vmatpush.msra.mxu0 %v980
    %1075 = vmatmul.f32.gmra.mxu0 %v985
    %v1076 = vpop.f32.mrf.mxu0
    %v1077 = vadd.f32 0.0, %v1076
    %1078 = vmatmul.f32.gmra.mxu0 %v988
    %v1079 = vpop.f32.mrf.mxu0
    %v1080 = vadd.f32 0.0, %v1079
    %1081 = vdwg.mxu0
    %v1082 = vadd.f32 %v945, %v1008
    %v1083 = vadd.f32 %v946, %v1031
    %v1084 = vadd.f32 %v947, %v1054
    %v1085 = vadd.f32 %v948, %v1077
    %v1086 = vadd.f32 %v949, %v1011
    %v1087 = vadd.f32 %v950, %v1034
    %v1088 = vadd.f32 %v951, %v1057
    %v1089 = vadd.f32 %v952, %v1080
    %1090 = vrot.lane.b32.xlu0 %v33, 111
    %v1091 = vpop.permute.xlu0 %1090
    %1092 = vrot.lane.b32.xlu0 %v34, 111
    %v1093 = vpop.permute.xlu0 %1092
    %1094 = vrot.lane.b32.xlu0 %v35, 111
    %v1095 = vpop.permute.xlu0 %1094
    %1096 = vrot.lane.b32.xlu0 %v36, 111
    %v1097 = vpop.permute.xlu0 %1096
    %vm1098 = vcmp.lt.s32.totalorder %v46, 111
    %v1099 = vsel %vm1098, %v1095, %v1097
    %v1100 = vsel %vm1098, %v1093, %v1095
    %v1101 = vsel %vm1098, %v1091, %v1093
    %v1102 = vsel %vm1098, %v1097, %v1091
    %s1103 = scalar_lea.vmem %s1, 7
    %v1104 = vld [vmem:[%s1103] ss:$8 sm:$0xf]
    %v1106 = vperm.slane %v1104, 0
    %v1107 = vperm.slane %v1104, 1
    %v1108 = vperm.slane %v1104, 2
    %v1109 = vperm.slane %v1104, 3
    %v1114 = vmul.f32 %v1101, %v1106
    %v1115 = vmul.f32 %v1100, %v1107
    %v1116 = vmul.f32 %v1099, %v1108
    %v1117 = vmul.f32 %v1102, %v1109
    %s1118 = scalar_lea.vmem %s2, 128
    %v1119 = vld [vmem:[%s1118] sm:$0xff]
    %v1120 = vld [vmem:[%s1118 + $0x8] sm:$0xff]
    %v1122 = vsel %vm99, %v1119, 0
    %v1125 = vsel %vm99, %v1120, 0
    %1127 = vmatpush.msra.mxu0 0.0
    %1128 = vmatpush.msra.mxu0 0.0
    %1129 = vmatpush.msra.mxu0 0.0
    %1130 = vmatpush.msra.mxu0 0.0
    %1131 = vmatpush.msra.mxu0 0.0
    %1132 = vmatpush.msra.mxu0 0.0
    %1133 = vmatpush.msra.mxu0 0.0
    %1134 = vmatpush.msra.mxu0 0.0
    %1135 = vmatpush.msra.mxu0 0.0
    %1136 = vmatpush.msra.mxu0 0.0
    %1137 = vmatpush.msra.mxu0 0.0
    %1138 = vmatpush.msra.mxu0 0.0
    %1139 = vmatpush.msra.mxu0 0.0
    %1140 = vmatpush.msra.mxu0 0.0
    %1141 = vmatpush.msra.mxu0 0.0
    %1142 = vmatpush.msra.mxu0 %v1114
    %1143 = vmatmul.f32.gmra.mxu0 %v1122
    %v1144 = vpop.f32.mrf.mxu0
    %v1145 = vadd.f32 0.0, %v1144
    %1146 = vmatmul.f32.gmra.mxu0 %v1125
    %v1147 = vpop.f32.mrf.mxu0
    %v1148 = vadd.f32 0.0, %v1147
    %1149 = vdwg.mxu0
    %1150 = vmatpush.msra.mxu0 0.0
    %1151 = vmatpush.msra.mxu0 0.0
    %1152 = vmatpush.msra.mxu0 0.0
    %1153 = vmatpush.msra.mxu0 0.0
    %1154 = vmatpush.msra.mxu0 0.0
    %1155 = vmatpush.msra.mxu0 0.0
    %1156 = vmatpush.msra.mxu0 0.0
    %1157 = vmatpush.msra.mxu0 0.0
    %1158 = vmatpush.msra.mxu0 0.0
    %1159 = vmatpush.msra.mxu0 0.0
    %1160 = vmatpush.msra.mxu0 0.0
    %1161 = vmatpush.msra.mxu0 0.0
    %1162 = vmatpush.msra.mxu0 0.0
    %1163 = vmatpush.msra.mxu0 0.0
    %1164 = vmatpush.msra.mxu0 0.0
    %1165 = vmatpush.msra.mxu0 %v1115
    %1166 = vmatmul.f32.gmra.mxu0 %v1122
    %v1167 = vpop.f32.mrf.mxu0
    %v1168 = vadd.f32 0.0, %v1167
    %1169 = vmatmul.f32.gmra.mxu0 %v1125
    %v1170 = vpop.f32.mrf.mxu0
    %v1171 = vadd.f32 0.0, %v1170
    %1172 = vdwg.mxu0
    %1173 = vmatpush.msra.mxu0 0.0
    %1174 = vmatpush.msra.mxu0 0.0
    %1175 = vmatpush.msra.mxu0 0.0
    %1176 = vmatpush.msra.mxu0 0.0
    %1177 = vmatpush.msra.mxu0 0.0
    %1178 = vmatpush.msra.mxu0 0.0
    %1179 = vmatpush.msra.mxu0 0.0
    %1180 = vmatpush.msra.mxu0 0.0
    %1181 = vmatpush.msra.mxu0 0.0
    %1182 = vmatpush.msra.mxu0 0.0
    %1183 = vmatpush.msra.mxu0 0.0
    %1184 = vmatpush.msra.mxu0 0.0
    %1185 = vmatpush.msra.mxu0 0.0
    %1186 = vmatpush.msra.mxu0 0.0
    %1187 = vmatpush.msra.mxu0 0.0
    %1188 = vmatpush.msra.mxu0 %v1116
    %1189 = vmatmul.f32.gmra.mxu0 %v1122
    %v1190 = vpop.f32.mrf.mxu0
    %v1191 = vadd.f32 0.0, %v1190
    %1192 = vmatmul.f32.gmra.mxu0 %v1125
    %v1193 = vpop.f32.mrf.mxu0
    %v1194 = vadd.f32 0.0, %v1193
    %1195 = vdwg.mxu0
    %1196 = vmatpush.msra.mxu0 0.0
    %1197 = vmatpush.msra.mxu0 0.0
    %1198 = vmatpush.msra.mxu0 0.0
    %1199 = vmatpush.msra.mxu0 0.0
    %1200 = vmatpush.msra.mxu0 0.0
    %1201 = vmatpush.msra.mxu0 0.0
    %1202 = vmatpush.msra.mxu0 0.0
    %1203 = vmatpush.msra.mxu0 0.0
    %1204 = vmatpush.msra.mxu0 0.0
    %1205 = vmatpush.msra.mxu0 0.0
    %1206 = vmatpush.msra.mxu0 0.0
    %1207 = vmatpush.msra.mxu0 0.0
    %1208 = vmatpush.msra.mxu0 0.0
    %1209 = vmatpush.msra.mxu0 0.0
    %1210 = vmatpush.msra.mxu0 0.0
    %1211 = vmatpush.msra.mxu0 %v1117
    %1212 = vmatmul.f32.gmra.mxu0 %v1122
    %v1213 = vpop.f32.mrf.mxu0
    %v1214 = vadd.f32 0.0, %v1213
    %1215 = vmatmul.f32.gmra.mxu0 %v1125
    %v1216 = vpop.f32.mrf.mxu0
    %v1217 = vadd.f32 0.0, %v1216
    %1218 = vdwg.mxu0
    %v1219 = vadd.f32 %v1082, %v1145
    %v1220 = vadd.f32 %v1083, %v1168
    %v1221 = vadd.f32 %v1084, %v1191
    %v1222 = vadd.f32 %v1085, %v1214
    %v1223 = vadd.f32 %v1086, %v1148
    %v1224 = vadd.f32 %v1087, %v1171
    %v1225 = vadd.f32 %v1088, %v1194
    %v1226 = vadd.f32 %v1089, %v1217
    %v1227 = vld [vmem:[%s8] sm:$0xff]
    %1229 = vset.pattern.permute.xlu0 0
    %1230 = vperm.xlu0 %1229, %v1227
    %v1231 = vpop.permute.xlu0 %1230
    %v1233 = vadd.f32 %v1223, %v1231
    %v1234 = vadd.f32 %v1224, %v1231
    %v1235 = vadd.f32 %v1225, %v1231
    %v1236 = vadd.f32 %v1226, %v1231
    %v1237 = vld [vmem:[%s4] sm:$0xff]
    %v1238 = vld [vmem:[%s5] sm:$0xff]
    %v1239 = vadd.f32 %v1219, %v1220
    %v1240 = vadd.f32 %v1239, %v1221
    %v1241 = vadd.f32 %v1240, %v1222
    %1242 = vadd.xlane.f32.xlu0 %v1241
    %v1243 = vpop.xlane.xlu0 %1242
    %v1244 = vmul.f32 %v1243, 0.001953125
    %v1245 = vmul.f32 %v1219, %v1219
    %v1246 = vmul.f32 %v1220, %v1220
    %v1247 = vmul.f32 %v1221, %v1221
    %v1248 = vmul.f32 %v1222, %v1222
    %v1249 = vadd.f32 %v1245, %v1246
    %v1250 = vadd.f32 %v1249, %v1247
    %v1251 = vadd.f32 %v1250, %v1248
    %1252 = vadd.xlane.f32.xlu0 %v1251
    %v1253 = vpop.xlane.xlu0 %1252
    %v1254 = vmul.f32 %v1253, 0.001953125
    %v1255 = vmul.f32 %v1244, %v1244
    %v1256 = vsub.f32 %v1254, %v1255
    %v1257 = vmax.f32 %v1256, 0.0
    %v1258 = vsub.f32 %v1219, %v1244
    %v1259 = vsub.f32 %v1220, %v1244
    %v1260 = vsub.f32 %v1221, %v1244
    %v1261 = vsub.f32 %v1222, %v1244
    %v1262 = vadd.f32 %v1257, 1e-05
    %v1263 = vrsqrt.pop %v1262
    %v1264 = vmul.f32 %v1263, %v1262
    %v1265 = vmul.f32 %v1264, %v1263
    %v1266 = vmul.f32 0.5, %v1265
    %v1267 = vsub.f32 1.5, %v1266
    %v1268 = vmul.f32 %v1263, %v1267
    %vm1269 = vweird.f32 %v1262
    %vm1270 = vweird.f32 %v1263
    %vm1271 = vmor %vm1269, %vm1270
    %v1272 = vsel %vm1271, %v1263, %v1268
    %v1273 = vmul.f32 %v1272, %v1237
    %1275 = vset.pattern.permute.xlu0 0
    %1276 = vperm.xlu0 %1275, %v1273
    %v1277 = vpop.permute.xlu0 %1276
    %v1279 = vmul.f32 %v1258, %v1277
    %v1280 = vmul.f32 %v1259, %v1277
    %v1281 = vmul.f32 %v1260, %v1277
    %v1282 = vmul.f32 %v1261, %v1277
    %1284 = vset.pattern.permute.xlu0 0
    %1285 = vperm.xlu0 %1284, %v1238
    %v1286 = vpop.permute.xlu0 %1285
    %v1288 = vadd.f32 %v1279, %v1286
    %v1289 = vadd.f32 %v1280, %v1286
    %v1290 = vadd.f32 %v1281, %v1286
    %v1291 = vadd.f32 %v1282, %v1286
    %v1292 = vmax.f32 %v1288, 0.0
    %v1293 = vmax.f32 %v1289, 0.0
    %v1294 = vmax.f32 %v1290, 0.0
    %v1295 = vmax.f32 %v1291, 0.0
    %1296 = vrot.lane.b32.xlu0 %v1292, 17
    %v1297 = vpop.permute.xlu0 %1296
    %1298 = vrot.lane.b32.xlu0 %v1293, 17
    %v1299 = vpop.permute.xlu0 %1298
    %1300 = vrot.lane.b32.xlu0 %v1294, 17
    %v1301 = vpop.permute.xlu0 %1300
    %1302 = vrot.lane.b32.xlu0 %v1295, 17
    %v1303 = vpop.permute.xlu0 %1302
    %v1304 = vsel %vm47, %v1301, %v1303
    %v1305 = vsel %vm47, %v1299, %v1301
    %v1306 = vsel %vm47, %v1297, %v1299
    %v1307 = vsel %vm47, %v1303, %v1297
    %v1308 = vmul.f32 %v1307, %v54
    %v1309 = vmul.f32 %v1306, %v55
    %v1310 = vmul.f32 %v1305, %v56
    %v1311 = vmul.f32 %v1304, %v57
    %v1312 = vld [vmem:[%s3] sm:$0xff]
    %1313 = vrot.lane.b32.xlu0 %v1292, 16
    %v1314 = vpop.permute.xlu0 %1313
    %1315 = vrot.lane.b32.xlu0 %v1293, 16
    %v1316 = vpop.permute.xlu0 %1315
    %1317 = vrot.lane.b32.xlu0 %v1294, 16
    %v1318 = vpop.permute.xlu0 %1317
    %1319 = vrot.lane.b32.xlu0 %v1295, 16
    %v1320 = vpop.permute.xlu0 %1319
    %v1321 = vsel %vm76, %v1318, %v1320
    %v1322 = vsel %vm76, %v1316, %v1318
    %v1323 = vsel %vm76, %v1314, %v1316
    %v1324 = vsel %vm76, %v1320, %v1314
    %v1325 = vmul.f32 %v1324, %v84
    %v1326 = vmul.f32 %v1323, %v85
    %v1327 = vmul.f32 %v1322, %v86
    %v1328 = vmul.f32 %v1321, %v87
    %s1329 = scalar_lea.vmem %s3, 8
    %v1330 = vld [vmem:[%s1329] sm:$0xff]
    %v1332 = vsel %vm99, %v1330, 0
    %1334 = vmatpush.msra.mxu0 0.0
    %1335 = vmatpush.msra.mxu0 0.0
    %1336 = vmatpush.msra.mxu0 0.0
    %1337 = vmatpush.msra.mxu0 0.0
    %1338 = vmatpush.msra.mxu0 0.0
    %1339 = vmatpush.msra.mxu0 0.0
    %1340 = vmatpush.msra.mxu0 0.0
    %1341 = vmatpush.msra.mxu0 0.0
    %1342 = vmatpush.msra.mxu0 0.0
    %1343 = vmatpush.msra.mxu0 0.0
    %1344 = vmatpush.msra.mxu0 0.0
    %1345 = vmatpush.msra.mxu0 0.0
    %1346 = vmatpush.msra.mxu0 0.0
    %1347 = vmatpush.msra.mxu0 0.0
    %1348 = vmatpush.msra.mxu0 0.0
    %1349 = vmatpush.msra.mxu0 %v1325
    %1350 = vmatmul.f32.gmra.mxu0 %v1332
    %v1351 = vpop.f32.mrf.mxu0
    %v1352 = vadd.f32 0.0, %v1351
    %1353 = vdwg.mxu0
    %1354 = vmatpush.msra.mxu0 0.0
    %1355 = vmatpush.msra.mxu0 0.0
    %1356 = vmatpush.msra.mxu0 0.0
    %1357 = vmatpush.msra.mxu0 0.0
    %1358 = vmatpush.msra.mxu0 0.0
    %1359 = vmatpush.msra.mxu0 0.0
    %1360 = vmatpush.msra.mxu0 0.0
    %1361 = vmatpush.msra.mxu0 0.0
    %1362 = vmatpush.msra.mxu0 0.0
    %1363 = vmatpush.msra.mxu0 0.0
    %1364 = vmatpush.msra.mxu0 0.0
    %1365 = vmatpush.msra.mxu0 0.0
    %1366 = vmatpush.msra.mxu0 0.0
    %1367 = vmatpush.msra.mxu0 0.0
    %1368 = vmatpush.msra.mxu0 0.0
    %1369 = vmatpush.msra.mxu0 %v1326
    %1370 = vmatmul.f32.gmra.mxu0 %v1332
    %v1371 = vpop.f32.mrf.mxu0
    %v1372 = vadd.f32 0.0, %v1371
    %1373 = vdwg.mxu0
    %1374 = vmatpush.msra.mxu0 0.0
    %1375 = vmatpush.msra.mxu0 0.0
    %1376 = vmatpush.msra.mxu0 0.0
    %1377 = vmatpush.msra.mxu0 0.0
    %1378 = vmatpush.msra.mxu0 0.0
    %1379 = vmatpush.msra.mxu0 0.0
    %1380 = vmatpush.msra.mxu0 0.0
    %1381 = vmatpush.msra.mxu0 0.0
    %1382 = vmatpush.msra.mxu0 0.0
    %1383 = vmatpush.msra.mxu0 0.0
    %1384 = vmatpush.msra.mxu0 0.0
    %1385 = vmatpush.msra.mxu0 0.0
    %1386 = vmatpush.msra.mxu0 0.0
    %1387 = vmatpush.msra.mxu0 0.0
    %1388 = vmatpush.msra.mxu0 0.0
    %1389 = vmatpush.msra.mxu0 %v1327
    %1390 = vmatmul.f32.gmra.mxu0 %v1332
    %v1391 = vpop.f32.mrf.mxu0
    %v1392 = vadd.f32 0.0, %v1391
    %1393 = vdwg.mxu0
    %1394 = vmatpush.msra.mxu0 0.0
    %1395 = vmatpush.msra.mxu0 0.0
    %1396 = vmatpush.msra.mxu0 0.0
    %1397 = vmatpush.msra.mxu0 0.0
    %1398 = vmatpush.msra.mxu0 0.0
    %1399 = vmatpush.msra.mxu0 0.0
    %1400 = vmatpush.msra.mxu0 0.0
    %1401 = vmatpush.msra.mxu0 0.0
    %1402 = vmatpush.msra.mxu0 0.0
    %1403 = vmatpush.msra.mxu0 0.0
    %1404 = vmatpush.msra.mxu0 0.0
    %1405 = vmatpush.msra.mxu0 0.0
    %1406 = vmatpush.msra.mxu0 0.0
    %1407 = vmatpush.msra.mxu0 0.0
    %1408 = vmatpush.msra.mxu0 0.0
    %1409 = vmatpush.msra.mxu0 %v1328
    %1410 = vmatmul.f32.gmra.mxu0 %v1332
    %v1411 = vpop.f32.mrf.mxu0
    %v1412 = vadd.f32 0.0, %v1411
    %1413 = vdwg.mxu0
    %v1415 = vsel %vm99, %v1312, 0
    %1417 = vmatpush.msra.mxu0 0.0
    %1418 = vmatpush.msra.mxu0 0.0
    %1419 = vmatpush.msra.mxu0 0.0
    %1420 = vmatpush.msra.mxu0 0.0
    %1421 = vmatpush.msra.mxu0 0.0
    %1422 = vmatpush.msra.mxu0 0.0
    %1423 = vmatpush.msra.mxu0 0.0
    %1424 = vmatpush.msra.mxu0 0.0
    %1425 = vmatpush.msra.mxu0 0.0
    %1426 = vmatpush.msra.mxu0 0.0
    %1427 = vmatpush.msra.mxu0 0.0
    %1428 = vmatpush.msra.mxu0 0.0
    %1429 = vmatpush.msra.mxu0 0.0
    %1430 = vmatpush.msra.mxu0 0.0
    %1431 = vmatpush.msra.mxu0 0.0
    %1432 = vmatpush.msra.mxu0 %v1308
    %1433 = vmatmul.f32.gmra.mxu0 %v1415
    %v1434 = vpop.f32.mrf.mxu0
    %v1435 = vadd.f32 %v1352, %v1434
    %1436 = vdwg.mxu0
    %1437 = vmatpush.msra.mxu0 0.0
    %1438 = vmatpush.msra.mxu0 0.0
    %1439 = vmatpush.msra.mxu0 0.0
    %1440 = vmatpush.msra.mxu0 0.0
    %1441 = vmatpush.msra.mxu0 0.0
    %1442 = vmatpush.msra.mxu0 0.0
    %1443 = vmatpush.msra.mxu0 0.0
    %1444 = vmatpush.msra.mxu0 0.0
    %1445 = vmatpush.msra.mxu0 0.0
    %1446 = vmatpush.msra.mxu0 0.0
    %1447 = vmatpush.msra.mxu0 0.0
    %1448 = vmatpush.msra.mxu0 0.0
    %1449 = vmatpush.msra.mxu0 0.0
    %1450 = vmatpush.msra.mxu0 0.0
    %1451 = vmatpush.msra.mxu0 0.0
    %1452 = vmatpush.msra.mxu0 %v1309
    %1453 = vmatmul.f32.gmra.mxu0 %v1415
    %v1454 = vpop.f32.mrf.mxu0
    %v1455 = vadd.f32 %v1372, %v1454
    %1456 = vdwg.mxu0
    %1457 = vmatpush.msra.mxu0 0.0
    %1458 = vmatpush.msra.mxu0 0.0
    %1459 = vmatpush.msra.mxu0 0.0
    %1460 = vmatpush.msra.mxu0 0.0
    %1461 = vmatpush.msra.mxu0 0.0
    %1462 = vmatpush.msra.mxu0 0.0
    %1463 = vmatpush.msra.mxu0 0.0
    %1464 = vmatpush.msra.mxu0 0.0
    %1465 = vmatpush.msra.mxu0 0.0
    %1466 = vmatpush.msra.mxu0 0.0
    %1467 = vmatpush.msra.mxu0 0.0
    %1468 = vmatpush.msra.mxu0 0.0
    %1469 = vmatpush.msra.mxu0 0.0
    %1470 = vmatpush.msra.mxu0 0.0
    %1471 = vmatpush.msra.mxu0 0.0
    %1472 = vmatpush.msra.mxu0 %v1310
    %1473 = vmatmul.f32.gmra.mxu0 %v1415
    %v1474 = vpop.f32.mrf.mxu0
    %v1475 = vadd.f32 %v1392, %v1474
    %1476 = vdwg.mxu0
    %1477 = vmatpush.msra.mxu0 0.0
    %1478 = vmatpush.msra.mxu0 0.0
    %1479 = vmatpush.msra.mxu0 0.0
    %1480 = vmatpush.msra.mxu0 0.0
    %1481 = vmatpush.msra.mxu0 0.0
    %1482 = vmatpush.msra.mxu0 0.0
    %1483 = vmatpush.msra.mxu0 0.0
    %1484 = vmatpush.msra.mxu0 0.0
    %1485 = vmatpush.msra.mxu0 0.0
    %1486 = vmatpush.msra.mxu0 0.0
    %1487 = vmatpush.msra.mxu0 0.0
    %1488 = vmatpush.msra.mxu0 0.0
    %1489 = vmatpush.msra.mxu0 0.0
    %1490 = vmatpush.msra.mxu0 0.0
    %1491 = vmatpush.msra.mxu0 0.0
    %1492 = vmatpush.msra.mxu0 %v1311
    %1493 = vmatmul.f32.gmra.mxu0 %v1415
    %v1494 = vpop.f32.mrf.mxu0
    %v1495 = vadd.f32 %v1412, %v1494
    %1496 = vdwg.mxu0
    %1497 = vrot.lane.b32.xlu0 %v1292, 15
    %v1498 = vpop.permute.xlu0 %1497
    %1499 = vrot.lane.b32.xlu0 %v1293, 15
    %v1500 = vpop.permute.xlu0 %1499
    %1501 = vrot.lane.b32.xlu0 %v1294, 15
    %v1502 = vpop.permute.xlu0 %1501
    %1503 = vrot.lane.b32.xlu0 %v1295, 15
    %v1504 = vpop.permute.xlu0 %1503
    %v1505 = vsel %vm304, %v1502, %v1504
    %v1506 = vsel %vm304, %v1500, %v1502
    %v1507 = vsel %vm304, %v1498, %v1500
    %v1508 = vsel %vm304, %v1504, %v1498
    %v1509 = vmul.f32 %v1508, %v312
    %v1510 = vmul.f32 %v1507, %v313
    %v1511 = vmul.f32 %v1506, %v314
    %v1512 = vmul.f32 %v1505, %v315
    %s1513 = scalar_lea.vmem %s3, 16
    %v1514 = vld [vmem:[%s1513] sm:$0xff]
    %v1516 = vsel %vm99, %v1514, 0
    %1518 = vmatpush.msra.mxu0 0.0
    %1519 = vmatpush.msra.mxu0 0.0
    %1520 = vmatpush.msra.mxu0 0.0
    %1521 = vmatpush.msra.mxu0 0.0
    %1522 = vmatpush.msra.mxu0 0.0
    %1523 = vmatpush.msra.mxu0 0.0
    %1524 = vmatpush.msra.mxu0 0.0
    %1525 = vmatpush.msra.mxu0 0.0
    %1526 = vmatpush.msra.mxu0 0.0
    %1527 = vmatpush.msra.mxu0 0.0
    %1528 = vmatpush.msra.mxu0 0.0
    %1529 = vmatpush.msra.mxu0 0.0
    %1530 = vmatpush.msra.mxu0 0.0
    %1531 = vmatpush.msra.mxu0 0.0
    %1532 = vmatpush.msra.mxu0 0.0
    %1533 = vmatpush.msra.mxu0 %v1509
    %1534 = vmatmul.f32.gmra.mxu0 %v1516
    %v1535 = vpop.f32.mrf.mxu0
    %v1536 = vadd.f32 0.0, %v1535
    %1537 = vdwg.mxu0
    %1538 = vmatpush.msra.mxu0 0.0
    %1539 = vmatpush.msra.mxu0 0.0
    %1540 = vmatpush.msra.mxu0 0.0
    %1541 = vmatpush.msra.mxu0 0.0
    %1542 = vmatpush.msra.mxu0 0.0
    %1543 = vmatpush.msra.mxu0 0.0
    %1544 = vmatpush.msra.mxu0 0.0
    %1545 = vmatpush.msra.mxu0 0.0
    %1546 = vmatpush.msra.mxu0 0.0
    %1547 = vmatpush.msra.mxu0 0.0
    %1548 = vmatpush.msra.mxu0 0.0
    %1549 = vmatpush.msra.mxu0 0.0
    %1550 = vmatpush.msra.mxu0 0.0
    %1551 = vmatpush.msra.mxu0 0.0
    %1552 = vmatpush.msra.mxu0 0.0
    %1553 = vmatpush.msra.mxu0 %v1510
    %1554 = vmatmul.f32.gmra.mxu0 %v1516
    %v1555 = vpop.f32.mrf.mxu0
    %v1556 = vadd.f32 0.0, %v1555
    %1557 = vdwg.mxu0
    %1558 = vmatpush.msra.mxu0 0.0
    %1559 = vmatpush.msra.mxu0 0.0
    %1560 = vmatpush.msra.mxu0 0.0
    %1561 = vmatpush.msra.mxu0 0.0
    %1562 = vmatpush.msra.mxu0 0.0
    %1563 = vmatpush.msra.mxu0 0.0
    %1564 = vmatpush.msra.mxu0 0.0
    %1565 = vmatpush.msra.mxu0 0.0
    %1566 = vmatpush.msra.mxu0 0.0
    %1567 = vmatpush.msra.mxu0 0.0
    %1568 = vmatpush.msra.mxu0 0.0
    %1569 = vmatpush.msra.mxu0 0.0
    %1570 = vmatpush.msra.mxu0 0.0
    %1571 = vmatpush.msra.mxu0 0.0
    %1572 = vmatpush.msra.mxu0 0.0
    %1573 = vmatpush.msra.mxu0 %v1511
    %1574 = vmatmul.f32.gmra.mxu0 %v1516
    %v1575 = vpop.f32.mrf.mxu0
    %v1576 = vadd.f32 0.0, %v1575
    %1577 = vdwg.mxu0
    %1578 = vmatpush.msra.mxu0 0.0
    %1579 = vmatpush.msra.mxu0 0.0
    %1580 = vmatpush.msra.mxu0 0.0
    %1581 = vmatpush.msra.mxu0 0.0
    %1582 = vmatpush.msra.mxu0 0.0
    %1583 = vmatpush.msra.mxu0 0.0
    %1584 = vmatpush.msra.mxu0 0.0
    %1585 = vmatpush.msra.mxu0 0.0
    %1586 = vmatpush.msra.mxu0 0.0
    %1587 = vmatpush.msra.mxu0 0.0
    %1588 = vmatpush.msra.mxu0 0.0
    %1589 = vmatpush.msra.mxu0 0.0
    %1590 = vmatpush.msra.mxu0 0.0
    %1591 = vmatpush.msra.mxu0 0.0
    %1592 = vmatpush.msra.mxu0 0.0
    %1593 = vmatpush.msra.mxu0 %v1512
    %1594 = vmatmul.f32.gmra.mxu0 %v1516
    %v1595 = vpop.f32.mrf.mxu0
    %v1596 = vadd.f32 0.0, %v1595
    %1597 = vdwg.mxu0
    %v1598 = vadd.f32 %v1435, %v1536
    %v1599 = vadd.f32 %v1455, %v1556
    %v1600 = vadd.f32 %v1475, %v1576
    %v1601 = vadd.f32 %v1495, %v1596
    %1602 = vrot.lane.b32.xlu0 %v1292, 1
    %v1603 = vpop.permute.xlu0 %1602
    %1604 = vrot.lane.b32.xlu0 %v1293, 1
    %v1605 = vpop.permute.xlu0 %1604
    %1606 = vrot.lane.b32.xlu0 %v1294, 1
    %v1607 = vpop.permute.xlu0 %1606
    %1608 = vrot.lane.b32.xlu0 %v1295, 1
    %v1609 = vpop.permute.xlu0 %1608
    %v1610 = vsel %vm441, %v1607, %v1609
    %v1611 = vsel %vm441, %v1605, %v1607
    %v1612 = vsel %vm441, %v1603, %v1605
    %v1613 = vsel %vm441, %v1609, %v1603
    %v1614 = vmul.f32 %v1613, %v449
    %v1615 = vmul.f32 %v1612, %v450
    %v1616 = vmul.f32 %v1611, %v451
    %v1617 = vmul.f32 %v1610, %v452
    %s1618 = scalar_lea.vmem %s3, 24
    %v1619 = vld [vmem:[%s1618] sm:$0xff]
    %v1621 = vsel %vm99, %v1619, 0
    %1623 = vmatpush.msra.mxu0 0.0
    %1624 = vmatpush.msra.mxu0 0.0
    %1625 = vmatpush.msra.mxu0 0.0
    %1626 = vmatpush.msra.mxu0 0.0
    %1627 = vmatpush.msra.mxu0 0.0
    %1628 = vmatpush.msra.mxu0 0.0
    %1629 = vmatpush.msra.mxu0 0.0
    %1630 = vmatpush.msra.mxu0 0.0
    %1631 = vmatpush.msra.mxu0 0.0
    %1632 = vmatpush.msra.mxu0 0.0
    %1633 = vmatpush.msra.mxu0 0.0
    %1634 = vmatpush.msra.mxu0 0.0
    %1635 = vmatpush.msra.mxu0 0.0
    %1636 = vmatpush.msra.mxu0 0.0
    %1637 = vmatpush.msra.mxu0 0.0
    %1638 = vmatpush.msra.mxu0 %v1614
    %1639 = vmatmul.f32.gmra.mxu0 %v1621
    %v1640 = vpop.f32.mrf.mxu0
    %v1641 = vadd.f32 0.0, %v1640
    %1642 = vdwg.mxu0
    %1643 = vmatpush.msra.mxu0 0.0
    %1644 = vmatpush.msra.mxu0 0.0
    %1645 = vmatpush.msra.mxu0 0.0
    %1646 = vmatpush.msra.mxu0 0.0
    %1647 = vmatpush.msra.mxu0 0.0
    %1648 = vmatpush.msra.mxu0 0.0
    %1649 = vmatpush.msra.mxu0 0.0
    %1650 = vmatpush.msra.mxu0 0.0
    %1651 = vmatpush.msra.mxu0 0.0
    %1652 = vmatpush.msra.mxu0 0.0
    %1653 = vmatpush.msra.mxu0 0.0
    %1654 = vmatpush.msra.mxu0 0.0
    %1655 = vmatpush.msra.mxu0 0.0
    %1656 = vmatpush.msra.mxu0 0.0
    %1657 = vmatpush.msra.mxu0 0.0
    %1658 = vmatpush.msra.mxu0 %v1615
    %1659 = vmatmul.f32.gmra.mxu0 %v1621
    %v1660 = vpop.f32.mrf.mxu0
    %v1661 = vadd.f32 0.0, %v1660
    %1662 = vdwg.mxu0
    %1663 = vmatpush.msra.mxu0 0.0
    %1664 = vmatpush.msra.mxu0 0.0
    %1665 = vmatpush.msra.mxu0 0.0
    %1666 = vmatpush.msra.mxu0 0.0
    %1667 = vmatpush.msra.mxu0 0.0
    %1668 = vmatpush.msra.mxu0 0.0
    %1669 = vmatpush.msra.mxu0 0.0
    %1670 = vmatpush.msra.mxu0 0.0
    %1671 = vmatpush.msra.mxu0 0.0
    %1672 = vmatpush.msra.mxu0 0.0
    %1673 = vmatpush.msra.mxu0 0.0
    %1674 = vmatpush.msra.mxu0 0.0
    %1675 = vmatpush.msra.mxu0 0.0
    %1676 = vmatpush.msra.mxu0 0.0
    %1677 = vmatpush.msra.mxu0 0.0
    %1678 = vmatpush.msra.mxu0 %v1616
    %1679 = vmatmul.f32.gmra.mxu0 %v1621
    %v1680 = vpop.f32.mrf.mxu0
    %v1681 = vadd.f32 0.0, %v1680
    %1682 = vdwg.mxu0
    %1683 = vmatpush.msra.mxu0 0.0
    %1684 = vmatpush.msra.mxu0 0.0
    %1685 = vmatpush.msra.mxu0 0.0
    %1686 = vmatpush.msra.mxu0 0.0
    %1687 = vmatpush.msra.mxu0 0.0
    %1688 = vmatpush.msra.mxu0 0.0
    %1689 = vmatpush.msra.mxu0 0.0
    %1690 = vmatpush.msra.mxu0 0.0
    %1691 = vmatpush.msra.mxu0 0.0
    %1692 = vmatpush.msra.mxu0 0.0
    %1693 = vmatpush.msra.mxu0 0.0
    %1694 = vmatpush.msra.mxu0 0.0
    %1695 = vmatpush.msra.mxu0 0.0
    %1696 = vmatpush.msra.mxu0 0.0
    %1697 = vmatpush.msra.mxu0 0.0
    %1698 = vmatpush.msra.mxu0 %v1617
    %1699 = vmatmul.f32.gmra.mxu0 %v1621
    %v1700 = vpop.f32.mrf.mxu0
    %v1701 = vadd.f32 0.0, %v1700
    %1702 = vdwg.mxu0
    %v1703 = vadd.f32 %v1598, %v1641
    %v1704 = vadd.f32 %v1599, %v1661
    %v1705 = vadd.f32 %v1600, %v1681
    %v1706 = vadd.f32 %v1601, %v1701
    %s1707 = scalar_lea.vmem %s3, 32
    %v1708 = vld [vmem:[%s1707] sm:$0xff]
    %v1710 = vsel %vm99, %v1708, 0
    %1712 = vmatpush.msra.mxu0 0.0
    %1713 = vmatpush.msra.mxu0 0.0
    %1714 = vmatpush.msra.mxu0 0.0
    %1715 = vmatpush.msra.mxu0 0.0
    %1716 = vmatpush.msra.mxu0 0.0
    %1717 = vmatpush.msra.mxu0 0.0
    %1718 = vmatpush.msra.mxu0 0.0
    %1719 = vmatpush.msra.mxu0 0.0
    %1720 = vmatpush.msra.mxu0 0.0
    %1721 = vmatpush.msra.mxu0 0.0
    %1722 = vmatpush.msra.mxu0 0.0
    %1723 = vmatpush.msra.mxu0 0.0
    %1724 = vmatpush.msra.mxu0 0.0
    %1725 = vmatpush.msra.mxu0 0.0
    %1726 = vmatpush.msra.mxu0 0.0
    %1727 = vmatpush.msra.mxu0 %v1292
    %1728 = vmatmul.f32.gmra.mxu0 %v1710
    %v1729 = vpop.f32.mrf.mxu0
    %v1730 = vadd.f32 0.0, %v1729
    %1731 = vdwg.mxu0
    %1732 = vmatpush.msra.mxu0 0.0
    %1733 = vmatpush.msra.mxu0 0.0
    %1734 = vmatpush.msra.mxu0 0.0
    %1735 = vmatpush.msra.mxu0 0.0
    %1736 = vmatpush.msra.mxu0 0.0
    %1737 = vmatpush.msra.mxu0 0.0
    %1738 = vmatpush.msra.mxu0 0.0
    %1739 = vmatpush.msra.mxu0 0.0
    %1740 = vmatpush.msra.mxu0 0.0
    %1741 = vmatpush.msra.mxu0 0.0
    %1742 = vmatpush.msra.mxu0 0.0
    %1743 = vmatpush.msra.mxu0 0.0
    %1744 = vmatpush.msra.mxu0 0.0
    %1745 = vmatpush.msra.mxu0 0.0
    %1746 = vmatpush.msra.mxu0 0.0
    %1747 = vmatpush.msra.mxu0 %v1293
    %1748 = vmatmul.f32.gmra.mxu0 %v1710
    %v1749 = vpop.f32.mrf.mxu0
    %v1750 = vadd.f32 0.0, %v1749
    %1751 = vdwg.mxu0
    %1752 = vmatpush.msra.mxu0 0.0
    %1753 = vmatpush.msra.mxu0 0.0
    %1754 = vmatpush.msra.mxu0 0.0
    %1755 = vmatpush.msra.mxu0 0.0
    %1756 = vmatpush.msra.mxu0 0.0
    %1757 = vmatpush.msra.mxu0 0.0
    %1758 = vmatpush.msra.mxu0 0.0
    %1759 = vmatpush.msra.mxu0 0.0
    %1760 = vmatpush.msra.mxu0 0.0
    %1761 = vmatpush.msra.mxu0 0.0
    %1762 = vmatpush.msra.mxu0 0.0
    %1763 = vmatpush.msra.mxu0 0.0
    %1764 = vmatpush.msra.mxu0 0.0
    %1765 = vmatpush.msra.mxu0 0.0
    %1766 = vmatpush.msra.mxu0 0.0
    %1767 = vmatpush.msra.mxu0 %v1294
    %1768 = vmatmul.f32.gmra.mxu0 %v1710
    %v1769 = vpop.f32.mrf.mxu0
    %v1770 = vadd.f32 0.0, %v1769
    %1771 = vdwg.mxu0
    %1772 = vmatpush.msra.mxu0 0.0
    %1773 = vmatpush.msra.mxu0 0.0
    %1774 = vmatpush.msra.mxu0 0.0
    %1775 = vmatpush.msra.mxu0 0.0
    %1776 = vmatpush.msra.mxu0 0.0
    %1777 = vmatpush.msra.mxu0 0.0
    %1778 = vmatpush.msra.mxu0 0.0
    %1779 = vmatpush.msra.mxu0 0.0
    %1780 = vmatpush.msra.mxu0 0.0
    %1781 = vmatpush.msra.mxu0 0.0
    %1782 = vmatpush.msra.mxu0 0.0
    %1783 = vmatpush.msra.mxu0 0.0
    %1784 = vmatpush.msra.mxu0 0.0
    %1785 = vmatpush.msra.mxu0 0.0
    %1786 = vmatpush.msra.mxu0 0.0
    %1787 = vmatpush.msra.mxu0 %v1295
    %1788 = vmatmul.f32.gmra.mxu0 %v1710
    %v1789 = vpop.f32.mrf.mxu0
    %v1790 = vadd.f32 0.0, %v1789
    %1791 = vdwg.mxu0
    %v1792 = vadd.f32 %v1703, %v1730
    %v1793 = vadd.f32 %v1704, %v1750
    %v1794 = vadd.f32 %v1705, %v1770
    %v1795 = vadd.f32 %v1706, %v1790
    %1796 = vrot.lane.b32.xlu0 %v1292, 127
    %v1797 = vpop.permute.xlu0 %1796
    %1798 = vrot.lane.b32.xlu0 %v1293, 127
    %v1799 = vpop.permute.xlu0 %1798
    %1800 = vrot.lane.b32.xlu0 %v1294, 127
    %v1801 = vpop.permute.xlu0 %1800
    %1802 = vrot.lane.b32.xlu0 %v1295, 127
    %v1803 = vpop.permute.xlu0 %1802
    %v1804 = vsel %vm687, %v1801, %v1803
    %v1805 = vsel %vm687, %v1799, %v1801
    %v1806 = vsel %vm687, %v1797, %v1799
    %v1807 = vsel %vm687, %v1803, %v1797
    %v1808 = vmul.f32 %v1806, %v695
    %v1809 = vmul.f32 %v1805, %v696
    %v1810 = vmul.f32 %v1804, %v697
    %v1811 = vmul.f32 %v1807, %v698
    %s1812 = scalar_lea.vmem %s3, 40
    %v1813 = vld [vmem:[%s1812] sm:$0xff]
    %v1815 = vsel %vm99, %v1813, 0
    %1817 = vmatpush.msra.mxu0 0.0
    %1818 = vmatpush.msra.mxu0 0.0
    %1819 = vmatpush.msra.mxu0 0.0
    %1820 = vmatpush.msra.mxu0 0.0
    %1821 = vmatpush.msra.mxu0 0.0
    %1822 = vmatpush.msra.mxu0 0.0
    %1823 = vmatpush.msra.mxu0 0.0
    %1824 = vmatpush.msra.mxu0 0.0
    %1825 = vmatpush.msra.mxu0 0.0
    %1826 = vmatpush.msra.mxu0 0.0
    %1827 = vmatpush.msra.mxu0 0.0
    %1828 = vmatpush.msra.mxu0 0.0
    %1829 = vmatpush.msra.mxu0 0.0
    %1830 = vmatpush.msra.mxu0 0.0
    %1831 = vmatpush.msra.mxu0 0.0
    %1832 = vmatpush.msra.mxu0 %v1808
    %1833 = vmatmul.f32.gmra.mxu0 %v1815
    %v1834 = vpop.f32.mrf.mxu0
    %v1835 = vadd.f32 0.0, %v1834
    %1836 = vdwg.mxu0
    %1837 = vmatpush.msra.mxu0 0.0
    %1838 = vmatpush.msra.mxu0 0.0
    %1839 = vmatpush.msra.mxu0 0.0
    %1840 = vmatpush.msra.mxu0 0.0
    %1841 = vmatpush.msra.mxu0 0.0
    %1842 = vmatpush.msra.mxu0 0.0
    %1843 = vmatpush.msra.mxu0 0.0
    %1844 = vmatpush.msra.mxu0 0.0
    %1845 = vmatpush.msra.mxu0 0.0
    %1846 = vmatpush.msra.mxu0 0.0
    %1847 = vmatpush.msra.mxu0 0.0
    %1848 = vmatpush.msra.mxu0 0.0
    %1849 = vmatpush.msra.mxu0 0.0
    %1850 = vmatpush.msra.mxu0 0.0
    %1851 = vmatpush.msra.mxu0 0.0
    %1852 = vmatpush.msra.mxu0 %v1809
    %1853 = vmatmul.f32.gmra.mxu0 %v1815
    %v1854 = vpop.f32.mrf.mxu0
    %v1855 = vadd.f32 0.0, %v1854
    %1856 = vdwg.mxu0
    %1857 = vmatpush.msra.mxu0 0.0
    %1858 = vmatpush.msra.mxu0 0.0
    %1859 = vmatpush.msra.mxu0 0.0
    %1860 = vmatpush.msra.mxu0 0.0
    %1861 = vmatpush.msra.mxu0 0.0
    %1862 = vmatpush.msra.mxu0 0.0
    %1863 = vmatpush.msra.mxu0 0.0
    %1864 = vmatpush.msra.mxu0 0.0
    %1865 = vmatpush.msra.mxu0 0.0
    %1866 = vmatpush.msra.mxu0 0.0
    %1867 = vmatpush.msra.mxu0 0.0
    %1868 = vmatpush.msra.mxu0 0.0
    %1869 = vmatpush.msra.mxu0 0.0
    %1870 = vmatpush.msra.mxu0 0.0
    %1871 = vmatpush.msra.mxu0 0.0
    %1872 = vmatpush.msra.mxu0 %v1810
    %1873 = vmatmul.f32.gmra.mxu0 %v1815
    %v1874 = vpop.f32.mrf.mxu0
    %v1875 = vadd.f32 0.0, %v1874
    %1876 = vdwg.mxu0
    %1877 = vmatpush.msra.mxu0 0.0
    %1878 = vmatpush.msra.mxu0 0.0
    %1879 = vmatpush.msra.mxu0 0.0
    %1880 = vmatpush.msra.mxu0 0.0
    %1881 = vmatpush.msra.mxu0 0.0
    %1882 = vmatpush.msra.mxu0 0.0
    %1883 = vmatpush.msra.mxu0 0.0
    %1884 = vmatpush.msra.mxu0 0.0
    %1885 = vmatpush.msra.mxu0 0.0
    %1886 = vmatpush.msra.mxu0 0.0
    %1887 = vmatpush.msra.mxu0 0.0
    %1888 = vmatpush.msra.mxu0 0.0
    %1889 = vmatpush.msra.mxu0 0.0
    %1890 = vmatpush.msra.mxu0 0.0
    %1891 = vmatpush.msra.mxu0 0.0
    %1892 = vmatpush.msra.mxu0 %v1811
    %1893 = vmatmul.f32.gmra.mxu0 %v1815
    %v1894 = vpop.f32.mrf.mxu0
    %v1895 = vadd.f32 0.0, %v1894
    %1896 = vdwg.mxu0
    %v1897 = vadd.f32 %v1792, %v1835
    %v1898 = vadd.f32 %v1793, %v1855
    %v1899 = vadd.f32 %v1794, %v1875
    %v1900 = vadd.f32 %v1795, %v1895
    %1901 = vrot.lane.b32.xlu0 %v1292, 113
    %v1902 = vpop.permute.xlu0 %1901
    %1903 = vrot.lane.b32.xlu0 %v1293, 113
    %v1904 = vpop.permute.xlu0 %1903
    %1905 = vrot.lane.b32.xlu0 %v1294, 113
    %v1906 = vpop.permute.xlu0 %1905
    %1907 = vrot.lane.b32.xlu0 %v1295, 113
    %v1908 = vpop.permute.xlu0 %1907
    %v1909 = vsel %vm824, %v1906, %v1908
    %v1910 = vsel %vm824, %v1904, %v1906
    %v1911 = vsel %vm824, %v1902, %v1904
    %v1912 = vsel %vm824, %v1908, %v1902
    %v1913 = vmul.f32 %v1911, %v832
    %v1914 = vmul.f32 %v1910, %v833
    %v1915 = vmul.f32 %v1909, %v834
    %v1916 = vmul.f32 %v1912, %v835
    %s1917 = scalar_lea.vmem %s3, 48
    %v1918 = vld [vmem:[%s1917] sm:$0xff]
    %v1920 = vsel %vm99, %v1918, 0
    %1922 = vmatpush.msra.mxu0 0.0
    %1923 = vmatpush.msra.mxu0 0.0
    %1924 = vmatpush.msra.mxu0 0.0
    %1925 = vmatpush.msra.mxu0 0.0
    %1926 = vmatpush.msra.mxu0 0.0
    %1927 = vmatpush.msra.mxu0 0.0
    %1928 = vmatpush.msra.mxu0 0.0
    %1929 = vmatpush.msra.mxu0 0.0
    %1930 = vmatpush.msra.mxu0 0.0
    %1931 = vmatpush.msra.mxu0 0.0
    %1932 = vmatpush.msra.mxu0 0.0
    %1933 = vmatpush.msra.mxu0 0.0
    %1934 = vmatpush.msra.mxu0 0.0
    %1935 = vmatpush.msra.mxu0 0.0
    %1936 = vmatpush.msra.mxu0 0.0
    %1937 = vmatpush.msra.mxu0 %v1913
    %1938 = vmatmul.f32.gmra.mxu0 %v1920
    %v1939 = vpop.f32.mrf.mxu0
    %v1940 = vadd.f32 0.0, %v1939
    %1941 = vdwg.mxu0
    %1942 = vmatpush.msra.mxu0 0.0
    %1943 = vmatpush.msra.mxu0 0.0
    %1944 = vmatpush.msra.mxu0 0.0
    %1945 = vmatpush.msra.mxu0 0.0
    %1946 = vmatpush.msra.mxu0 0.0
    %1947 = vmatpush.msra.mxu0 0.0
    %1948 = vmatpush.msra.mxu0 0.0
    %1949 = vmatpush.msra.mxu0 0.0
    %1950 = vmatpush.msra.mxu0 0.0
    %1951 = vmatpush.msra.mxu0 0.0
    %1952 = vmatpush.msra.mxu0 0.0
    %1953 = vmatpush.msra.mxu0 0.0
    %1954 = vmatpush.msra.mxu0 0.0
    %1955 = vmatpush.msra.mxu0 0.0
    %1956 = vmatpush.msra.mxu0 0.0
    %1957 = vmatpush.msra.mxu0 %v1914
    %1958 = vmatmul.f32.gmra.mxu0 %v1920
    %v1959 = vpop.f32.mrf.mxu0
    %v1960 = vadd.f32 0.0, %v1959
    %1961 = vdwg.mxu0
    %1962 = vmatpush.msra.mxu0 0.0
    %1963 = vmatpush.msra.mxu0 0.0
    %1964 = vmatpush.msra.mxu0 0.0
    %1965 = vmatpush.msra.mxu0 0.0
    %1966 = vmatpush.msra.mxu0 0.0
    %1967 = vmatpush.msra.mxu0 0.0
    %1968 = vmatpush.msra.mxu0 0.0
    %1969 = vmatpush.msra.mxu0 0.0
    %1970 = vmatpush.msra.mxu0 0.0
    %1971 = vmatpush.msra.mxu0 0.0
    %1972 = vmatpush.msra.mxu0 0.0
    %1973 = vmatpush.msra.mxu0 0.0
    %1974 = vmatpush.msra.mxu0 0.0
    %1975 = vmatpush.msra.mxu0 0.0
    %1976 = vmatpush.msra.mxu0 0.0
    %1977 = vmatpush.msra.mxu0 %v1915
    %1978 = vmatmul.f32.gmra.mxu0 %v1920
    %v1979 = vpop.f32.mrf.mxu0
    %v1980 = vadd.f32 0.0, %v1979
    %1981 = vdwg.mxu0
    %1982 = vmatpush.msra.mxu0 0.0
    %1983 = vmatpush.msra.mxu0 0.0
    %1984 = vmatpush.msra.mxu0 0.0
    %1985 = vmatpush.msra.mxu0 0.0
    %1986 = vmatpush.msra.mxu0 0.0
    %1987 = vmatpush.msra.mxu0 0.0
    %1988 = vmatpush.msra.mxu0 0.0
    %1989 = vmatpush.msra.mxu0 0.0
    %1990 = vmatpush.msra.mxu0 0.0
    %1991 = vmatpush.msra.mxu0 0.0
    %1992 = vmatpush.msra.mxu0 0.0
    %1993 = vmatpush.msra.mxu0 0.0
    %1994 = vmatpush.msra.mxu0 0.0
    %1995 = vmatpush.msra.mxu0 0.0
    %1996 = vmatpush.msra.mxu0 0.0
    %1997 = vmatpush.msra.mxu0 %v1916
    %1998 = vmatmul.f32.gmra.mxu0 %v1920
    %v1999 = vpop.f32.mrf.mxu0
    %v2000 = vadd.f32 0.0, %v1999
    %2001 = vdwg.mxu0
    %v2002 = vadd.f32 %v1897, %v1940
    %v2003 = vadd.f32 %v1898, %v1960
    %v2004 = vadd.f32 %v1899, %v1980
    %v2005 = vadd.f32 %v1900, %v2000
    %2006 = vrot.lane.b32.xlu0 %v1292, 112
    %v2007 = vpop.permute.xlu0 %2006
    %2008 = vrot.lane.b32.xlu0 %v1293, 112
    %v2009 = vpop.permute.xlu0 %2008
    %2010 = vrot.lane.b32.xlu0 %v1294, 112
    %v2011 = vpop.permute.xlu0 %2010
    %2012 = vrot.lane.b32.xlu0 %v1295, 112
    %v2013 = vpop.permute.xlu0 %2012
    %v2014 = vsel %vm961, %v2011, %v2013
    %v2015 = vsel %vm961, %v2009, %v2011
    %v2016 = vsel %vm961, %v2007, %v2009
    %v2017 = vsel %vm961, %v2013, %v2007
    %v2018 = vmul.f32 %v2016, %v969
    %v2019 = vmul.f32 %v2015, %v970
    %v2020 = vmul.f32 %v2014, %v971
    %v2021 = vmul.f32 %v2017, %v972
    %s2022 = scalar_lea.vmem %s3, 56
    %v2023 = vld [vmem:[%s2022] sm:$0xff]
    %v2025 = vsel %vm99, %v2023, 0
    %2027 = vmatpush.msra.mxu0 0.0
    %2028 = vmatpush.msra.mxu0 0.0
    %2029 = vmatpush.msra.mxu0 0.0
    %2030 = vmatpush.msra.mxu0 0.0
    %2031 = vmatpush.msra.mxu0 0.0
    %2032 = vmatpush.msra.mxu0 0.0
    %2033 = vmatpush.msra.mxu0 0.0
    %2034 = vmatpush.msra.mxu0 0.0
    %2035 = vmatpush.msra.mxu0 0.0
    %2036 = vmatpush.msra.mxu0 0.0
    %2037 = vmatpush.msra.mxu0 0.0
    %2038 = vmatpush.msra.mxu0 0.0
    %2039 = vmatpush.msra.mxu0 0.0
    %2040 = vmatpush.msra.mxu0 0.0
    %2041 = vmatpush.msra.mxu0 0.0
    %2042 = vmatpush.msra.mxu0 %v2018
    %2043 = vmatmul.f32.gmra.mxu0 %v2025
    %v2044 = vpop.f32.mrf.mxu0
    %v2045 = vadd.f32 0.0, %v2044
    %2046 = vdwg.mxu0
    %2047 = vmatpush.msra.mxu0 0.0
    %2048 = vmatpush.msra.mxu0 0.0
    %2049 = vmatpush.msra.mxu0 0.0
    %2050 = vmatpush.msra.mxu0 0.0
    %2051 = vmatpush.msra.mxu0 0.0
    %2052 = vmatpush.msra.mxu0 0.0
    %2053 = vmatpush.msra.mxu0 0.0
    %2054 = vmatpush.msra.mxu0 0.0
    %2055 = vmatpush.msra.mxu0 0.0
    %2056 = vmatpush.msra.mxu0 0.0
    %2057 = vmatpush.msra.mxu0 0.0
    %2058 = vmatpush.msra.mxu0 0.0
    %2059 = vmatpush.msra.mxu0 0.0
    %2060 = vmatpush.msra.mxu0 0.0
    %2061 = vmatpush.msra.mxu0 0.0
    %2062 = vmatpush.msra.mxu0 %v2019
    %2063 = vmatmul.f32.gmra.mxu0 %v2025
    %v2064 = vpop.f32.mrf.mxu0
    %v2065 = vadd.f32 0.0, %v2064
    %2066 = vdwg.mxu0
    %2067 = vmatpush.msra.mxu0 0.0
    %2068 = vmatpush.msra.mxu0 0.0
    %2069 = vmatpush.msra.mxu0 0.0
    %2070 = vmatpush.msra.mxu0 0.0
    %2071 = vmatpush.msra.mxu0 0.0
    %2072 = vmatpush.msra.mxu0 0.0
    %2073 = vmatpush.msra.mxu0 0.0
    %2074 = vmatpush.msra.mxu0 0.0
    %2075 = vmatpush.msra.mxu0 0.0
    %2076 = vmatpush.msra.mxu0 0.0
    %2077 = vmatpush.msra.mxu0 0.0
    %2078 = vmatpush.msra.mxu0 0.0
    %2079 = vmatpush.msra.mxu0 0.0
    %2080 = vmatpush.msra.mxu0 0.0
    %2081 = vmatpush.msra.mxu0 0.0
    %2082 = vmatpush.msra.mxu0 %v2020
    %2083 = vmatmul.f32.gmra.mxu0 %v2025
    %v2084 = vpop.f32.mrf.mxu0
    %v2085 = vadd.f32 0.0, %v2084
    %2086 = vdwg.mxu0
    %2087 = vmatpush.msra.mxu0 0.0
    %2088 = vmatpush.msra.mxu0 0.0
    %2089 = vmatpush.msra.mxu0 0.0
    %2090 = vmatpush.msra.mxu0 0.0
    %2091 = vmatpush.msra.mxu0 0.0
    %2092 = vmatpush.msra.mxu0 0.0
    %2093 = vmatpush.msra.mxu0 0.0
    %2094 = vmatpush.msra.mxu0 0.0
    %2095 = vmatpush.msra.mxu0 0.0
    %2096 = vmatpush.msra.mxu0 0.0
    %2097 = vmatpush.msra.mxu0 0.0
    %2098 = vmatpush.msra.mxu0 0.0
    %2099 = vmatpush.msra.mxu0 0.0
    %2100 = vmatpush.msra.mxu0 0.0
    %2101 = vmatpush.msra.mxu0 0.0
    %2102 = vmatpush.msra.mxu0 %v2021
    %2103 = vmatmul.f32.gmra.mxu0 %v2025
    %v2104 = vpop.f32.mrf.mxu0
    %v2105 = vadd.f32 0.0, %v2104
    %2106 = vdwg.mxu0
    %v2107 = vadd.f32 %v2002, %v2045
    %v2108 = vadd.f32 %v2003, %v2065
    %v2109 = vadd.f32 %v2004, %v2085
    %v2110 = vadd.f32 %v2005, %v2105
    %2111 = vrot.lane.b32.xlu0 %v1292, 111
    %v2112 = vpop.permute.xlu0 %2111
    %2113 = vrot.lane.b32.xlu0 %v1293, 111
    %v2114 = vpop.permute.xlu0 %2113
    %2115 = vrot.lane.b32.xlu0 %v1294, 111
    %v2116 = vpop.permute.xlu0 %2115
    %2117 = vrot.lane.b32.xlu0 %v1295, 111
    %v2118 = vpop.permute.xlu0 %2117
    %v2119 = vsel %vm1098, %v2116, %v2118
    %v2120 = vsel %vm1098, %v2114, %v2116
    %v2121 = vsel %vm1098, %v2112, %v2114
    %v2122 = vsel %vm1098, %v2118, %v2112
    %v2123 = vmul.f32 %v2121, %v1106
    %v2124 = vmul.f32 %v2120, %v1107
    %v2125 = vmul.f32 %v2119, %v1108
    %v2126 = vmul.f32 %v2122, %v1109
    %s2127 = scalar_lea.vmem %s3, 64
    %v2128 = vld [vmem:[%s2127] sm:$0xff]
    %v2130 = vsel %vm99, %v2128, 0
    %2132 = vmatpush.msra.mxu0 0.0
    %2133 = vmatpush.msra.mxu0 0.0
    %2134 = vmatpush.msra.mxu0 0.0
    %2135 = vmatpush.msra.mxu0 0.0
    %2136 = vmatpush.msra.mxu0 0.0
    %2137 = vmatpush.msra.mxu0 0.0
    %2138 = vmatpush.msra.mxu0 0.0
    %2139 = vmatpush.msra.mxu0 0.0
    %2140 = vmatpush.msra.mxu0 0.0
    %2141 = vmatpush.msra.mxu0 0.0
    %2142 = vmatpush.msra.mxu0 0.0
    %2143 = vmatpush.msra.mxu0 0.0
    %2144 = vmatpush.msra.mxu0 0.0
    %2145 = vmatpush.msra.mxu0 0.0
    %2146 = vmatpush.msra.mxu0 0.0
    %2147 = vmatpush.msra.mxu0 %v2123
    %2148 = vmatmul.f32.gmra.mxu0 %v2130
    %v2149 = vpop.f32.mrf.mxu0
    %v2150 = vadd.f32 0.0, %v2149
    %2151 = vdwg.mxu0
    %2152 = vmatpush.msra.mxu0 0.0
    %2153 = vmatpush.msra.mxu0 0.0
    %2154 = vmatpush.msra.mxu0 0.0
    %2155 = vmatpush.msra.mxu0 0.0
    %2156 = vmatpush.msra.mxu0 0.0
    %2157 = vmatpush.msra.mxu0 0.0
    %2158 = vmatpush.msra.mxu0 0.0
    %2159 = vmatpush.msra.mxu0 0.0
    %2160 = vmatpush.msra.mxu0 0.0
    %2161 = vmatpush.msra.mxu0 0.0
    %2162 = vmatpush.msra.mxu0 0.0
    %2163 = vmatpush.msra.mxu0 0.0
    %2164 = vmatpush.msra.mxu0 0.0
    %2165 = vmatpush.msra.mxu0 0.0
    %2166 = vmatpush.msra.mxu0 0.0
    %2167 = vmatpush.msra.mxu0 %v2124
    %2168 = vmatmul.f32.gmra.mxu0 %v2130
    %v2169 = vpop.f32.mrf.mxu0
    %v2170 = vadd.f32 0.0, %v2169
    %2171 = vdwg.mxu0
    %2172 = vmatpush.msra.mxu0 0.0
    %2173 = vmatpush.msra.mxu0 0.0
    %2174 = vmatpush.msra.mxu0 0.0
    %2175 = vmatpush.msra.mxu0 0.0
    %2176 = vmatpush.msra.mxu0 0.0
    %2177 = vmatpush.msra.mxu0 0.0
    %2178 = vmatpush.msra.mxu0 0.0
    %2179 = vmatpush.msra.mxu0 0.0
    %2180 = vmatpush.msra.mxu0 0.0
    %2181 = vmatpush.msra.mxu0 0.0
    %2182 = vmatpush.msra.mxu0 0.0
    %2183 = vmatpush.msra.mxu0 0.0
    %2184 = vmatpush.msra.mxu0 0.0
    %2185 = vmatpush.msra.mxu0 0.0
    %2186 = vmatpush.msra.mxu0 0.0
    %2187 = vmatpush.msra.mxu0 %v2125
    %2188 = vmatmul.f32.gmra.mxu0 %v2130
    %v2189 = vpop.f32.mrf.mxu0
    %v2190 = vadd.f32 0.0, %v2189
    %2191 = vdwg.mxu0
    %2192 = vmatpush.msra.mxu0 0.0
    %2193 = vmatpush.msra.mxu0 0.0
    %2194 = vmatpush.msra.mxu0 0.0
    %2195 = vmatpush.msra.mxu0 0.0
    %2196 = vmatpush.msra.mxu0 0.0
    %2197 = vmatpush.msra.mxu0 0.0
    %2198 = vmatpush.msra.mxu0 0.0
    %2199 = vmatpush.msra.mxu0 0.0
    %2200 = vmatpush.msra.mxu0 0.0
    %2201 = vmatpush.msra.mxu0 0.0
    %2202 = vmatpush.msra.mxu0 0.0
    %2203 = vmatpush.msra.mxu0 0.0
    %2204 = vmatpush.msra.mxu0 0.0
    %2205 = vmatpush.msra.mxu0 0.0
    %2206 = vmatpush.msra.mxu0 0.0
    %2207 = vmatpush.msra.mxu0 %v2126
    %2208 = vmatmul.f32.gmra.mxu0 %v2130
    %v2209 = vpop.f32.mrf.mxu0
    %v2210 = vadd.f32 0.0, %v2209
    %2211 = vdwg.mxu0
    %v2212 = vadd.f32 %v2107, %v2150
    %v2213 = vadd.f32 %v2108, %v2170
    %v2214 = vadd.f32 %v2109, %v2190
    %v2215 = vadd.f32 %v2110, %v2210
    %v2216 = vld [vmem:[%s6] sm:$0xff]
    %v2217 = vld [vmem:[%s7] sm:$0xff]
    %v2218 = vadd.f32 %v2212, %v2213
    %v2219 = vadd.f32 %v2218, %v2214
    %v2220 = vadd.f32 %v2219, %v2215
    %2221 = vadd.xlane.f32.xlu0 %v2220
    %v2222 = vpop.xlane.xlu0 %2221
    %v2223 = vmul.f32 %v2222, 0.001953125
    %v2224 = vmul.f32 %v2212, %v2212
    %v2225 = vmul.f32 %v2213, %v2213
    %v2226 = vmul.f32 %v2214, %v2214
    %v2227 = vmul.f32 %v2215, %v2215
    %v2228 = vadd.f32 %v2224, %v2225
    %v2229 = vadd.f32 %v2228, %v2226
    %v2230 = vadd.f32 %v2229, %v2227
    %2231 = vadd.xlane.f32.xlu0 %v2230
    %v2232 = vpop.xlane.xlu0 %2231
    %v2233 = vmul.f32 %v2232, 0.001953125
    %v2234 = vmul.f32 %v2223, %v2223
    %v2235 = vsub.f32 %v2233, %v2234
    %v2236 = vmax.f32 %v2235, 0.0
    %v2237 = vsub.f32 %v2212, %v2223
    %v2238 = vsub.f32 %v2213, %v2223
    %v2239 = vsub.f32 %v2214, %v2223
    %v2240 = vsub.f32 %v2215, %v2223
    %v2241 = vadd.f32 %v2236, 1e-05
    %v2242 = vrsqrt.pop %v2241
    %v2243 = vmul.f32 %v2242, %v2241
    %v2244 = vmul.f32 %v2243, %v2242
    %v2245 = vmul.f32 0.5, %v2244
    %v2246 = vsub.f32 1.5, %v2245
    %v2247 = vmul.f32 %v2242, %v2246
    %vm2248 = vweird.f32 %v2241
    %vm2249 = vweird.f32 %v2242
    %vm2250 = vmor %vm2248, %vm2249
    %v2251 = vsel %vm2250, %v2242, %v2247
    %v2252 = vmul.f32 %v2251, %v2216
    %2254 = vset.pattern.permute.xlu0 0
    %2255 = vperm.xlu0 %2254, %v2252
    %v2256 = vpop.permute.xlu0 %2255
    %v2258 = vmul.f32 %v2237, %v2256
    %v2259 = vmul.f32 %v2238, %v2256
    %v2260 = vmul.f32 %v2239, %v2256
    %v2261 = vmul.f32 %v2240, %v2256
    %2263 = vset.pattern.permute.xlu0 0
    %2264 = vperm.xlu0 %2263, %v2217
    %v2265 = vpop.permute.xlu0 %2264
    %v2267 = vadd.f32 %v2258, %v2265
    %v2268 = vadd.f32 %v2259, %v2265
    %v2269 = vadd.f32 %v2260, %v2265
    %v2270 = vadd.f32 %v2261, %v2265
    %v2271 = vadd.f32 %v2267, %v1233
    %v2272 = vadd.f32 %v2268, %v1234
    %v2273 = vadd.f32 %v2269, %v1235
    %v2274 = vadd.f32 %v2270, %v1236
    %v2275 = vmax.f32 %v2271, 0.0
    %v2276 = vmax.f32 %v2272, 0.0
    %v2277 = vmax.f32 %v2273, 0.0
    %v2278 = vmax.f32 %v2274, 0.0
    %2279 = vst [vmem:[#allocation2] sm:$0xff] %v2275
    %2280 = vst [vmem:[#allocation2 + $0x8] sm:$0xff] %v2276
    %2281 = vst [vmem:[#allocation2 + $0x10] sm:$0xff] %v2277
    %2282 = vst [vmem:[#allocation2 + $0x18] sm:$0xff] %v2278
    // Predicated region
    $region38: #{tpu_custom_call.1} parent=1 // pred_check
      _
    $region39: #{tpu_custom_call.1} parent=1 // pred_check_branch
      %2284 = sbr.rel (0) target = $region41
    $region40: #{tpu_custom_call.1} parent=1 // pred_region
      %2286 = vsyncadd [#allocation3], 0
      %s2288 = sshll.u32 [#allocation2], 4
      %s2289 = int_to_ptr.vmem [resolvable:$true] %s2288
      %s2290 = sshll.u32 %s9, 4
      %s2291 = int_to_ptr.hbm [resolvable:$true] %s2290
      %2293 = dma.vmem_to_hbm [thread:$0]  %s2289, 512, %s2291, [#allocation3]
    $region41: #{tpu_custom_call.1} parent=1 // pred_fallthru
      _
    // Predicated region
    $region42: #{tpu_custom_call.1} parent=1 // pred_check
      _
    $region43: #{tpu_custom_call.1} parent=1 // pred_check_branch
      %2295 = sbr.rel (0) target = $region45
    $region44: #{tpu_custom_call.1} parent=1 // pred_region
      %2297 = dma.done [#allocation3], 512
    $region45: #{tpu_custom_call.1} parent=1 // pred_fallthru
      _
    %2298 = vsyncpa [#allocation3], 1

</llo_original>
